<compile_context>
chip_gen: v6e
topology: v6e:2x2x1
jax: 0.10.0
libtpu: 0.0.40
codegen_flags: <defaults>
</compile_context>

<pallas_src>
import jax
import jax.numpy as jnp
from jax.experimental import pallas as pl
from jax.experimental.pallas import tpu as pltpu

# ----------------------------- synthetic Config -----------------------------
WORD_EMBED_DIM   = 32
FEATURE_EMB_DIMS = (16,)                 # data.feature_emb_dims
FEATURE_NUM      = len(FEATURE_EMB_DIMS)
LSTM_HIDDEN_DIM  = 32                    # config.lstm_hidden_dim
LABEL_NUM        = 8                     # config.label_num
BILSTM_LAYERS    = 1                     # config.bilstm_layers
USE_CHAR         = False                 # config.use_char

B, S       = 2, 8                        # batch, sent_len
VOCAB      = 50
FEAT_VOCAB = 11

D_IN   = WORD_EMBED_DIM + sum(FEATURE_EMB_DIMS)   # LSTM input size (48)
H      = LSTM_HIDDEN_DIM // 2                     # per-direction hidden (16)
G      = 8 * H                                    # fused gate width (both dirs x 4 gates) = 128
BP     = 8                                        # padded batch rows (f32 sublane quantum)
IN_PAD = 128                                      # lane-padded fused input width (2*D_IN=96 -> 128)
OUT_PAD = 128                                     # lane-padded label width (8 -> 128)


# ------------------------------- Pallas kernel ------------------------------
def sequence_kernel(mask_ref, x_ref, w_ref, b_ref, out_ref, h_all_ref):
    """Fused bidirectional LSTM recurrence + hidden2tag projection.

    mask_ref : (S*BP, 2H) f32 {0,1}; row step*BP+b, fwd cols: step<len, bwd: S-1-step<len
    x_ref    : (S*BP, IN_PAD) bf16; row r = step*BP + b holds [x[step,b] | x[S-1-step,b] | 0-pad]
    w_ref    : (IN_PAD + 4H, 128) bf16; rows [0:IN_PAD]=w_ih, [IN_PAD:IN_PAD+2H]=w_hh,
               [IN_PAD+2H:IN_PAD+4H]=w_out (lane-padded); gate cols packed
               [i_f,i_b,f_f,f_b,o_f,o_b,g_f,g_b]
    b_ref    : (2, 128) f32; row 0 = fused LSTM gate bias, row 1 = hidden2tag bias (lane-padded)
    out_ref  : (S*BP, OUT_PAD) f32; time-major flattened, lane-padded logits
    h_all_ref: (S*BP, 2H) f32 VMEM scratch; [:, :H] fwd hidden, [:, H:] bwd hidden
    """
    mask = mask_ref[...]                                        # (S*BP, 2H) f32
    w_ih = w_ref[0:IN_PAD, :]                                   # (128, 128) bf16
    w_hh = w_ref[IN_PAD:IN_PAD + 2 * H, :]                      # (2H, 128) bf16
    w_out = w_ref[IN_PAD + 2 * H:IN_PAD + 4 * H, :]             # (2H, 128) bf16
    b_gate = b_ref[0:1, :]                                      # (1, 128) f32
    b_out = b_ref[1:2, :]                                       # (1, 128) f32

    # Defensive zero-init of the scratch (every row/half is also written once below).
    h_all_ref[...] = jnp.zeros_like(h_all_ref)

    # --- hoisted input projection: one lane-dense 128x128 matmul ------------
    xproj = (jnp.dot(x_ref[...], w_ih, preferred_element_type=jnp.float32)
             + b_gate)                                          # (S*BP, 8H) f32

    h = jnp.zeros((BP, 2 * H), jnp.float32)                     # [h_fwd | h_bwd]
    c = jnp.zeros((BP, 2 * H), jnp.float32)                     # [c_fwd | c_bwd]

    # --- fused fwd/bwd recurrence, fully unrolled (S is small and static) ---
    for step in range(S):
        tf = step                                               # forward time index
        tb = S - 1 - step                                       # backward time index
        rows = slice(step * BP, (step + 1) * BP)

        gates = xproj[rows, :] + jnp.dot(h.astype(jnp.bfloat16), w_hh,
                                         preferred_element_type=jnp.float32)  # (BP, 8H)
        sig = jax.nn.sigmoid(gates[:, :6 * H])                  # i | f | o, both directions
        g_g = jnp.tanh(gates[:, 6 * H:])                        # g,         both directions
        i_g = sig[:, 0:2 * H]
        f_g = sig[:, 2 * H:4 * H]
        o_g = sig[:, 4 * H:6 * H]
        c_new = f_g * c + i_g * g_g                             # (BP, 2H) fused fwd|bwd
        h_new = o_g * jnp.tanh(c_new)

        m = mask[rows, :]                                       # (BP, 2H) f32 {0,1}
        h = h + m * (h_new - h)                                 # freeze past length (packed)
        c = c + m * (c_new - c)
        h_store = m * h_new                                     # pad_packed -> zeros at pads
        h_all_ref[tf * BP:(tf + 1) * BP, 0:H] = h_store[:, 0:H]
        h_all_ref[tb * BP:(tb + 1) * BP, H:2 * H] = h_store[:, H:2 * H]

    # --- single lane-dense output projection over all (S*BP) rows -----------
    out_ref[...] = (jnp.dot(h_all_ref[...].astype(jnp.bfloat16), w_out,
                            preferred_element_type=jnp.float32)
                    + b_out).astype(out_ref.dtype)


# ---------------------------- weight re-packing ------------------------------
def _split_gates(w):
    """Split the last dim (4H, PyTorch order i,f,g,o) into the four gates."""
    return w[..., 0:H], w[..., H:2 * H], w[..., 2 * H:3 * H], w[..., 3 * H:4 * H]


def _pack_weights(params):
    """Pack all LSTM + hidden2tag weights into one bf16 (IN_PAD+4H, 128) array and
    one f32 (2, 128) bias array (gate columns: [i_f,i_b,f_f,f_b,o_f,o_b,g_f,g_b])."""
    i_f, f_f, g_f, o_f = _split_gates(params["wih_f"])          # each (D_IN, H)
    i_b, f_b, g_b, o_b = _split_gates(params["wih_b"])
    zD = jnp.zeros((D_IN, H), jnp.float32)
    wih = jnp.concatenate([
        jnp.concatenate([i_f, zD, f_f, zD, o_f, zD, g_f, zD], axis=1),
        jnp.concatenate([zD, i_b, zD, f_b, zD, o_b, zD, g_b], axis=1),
    ], axis=0)                                                  # (2*D_IN, 8H) = (96, 128)
    wih = jnp.pad(wih, ((0, IN_PAD - 2 * D_IN), (0, 0)))        # (128, 128)

    ri_f, rf_f, rg_f, ro_f = _split_gates(params["whh_f"])      # each (H, H)
    ri_b, rf_b, rg_b, ro_b = _split_gates(params["whh_b"])
    zH = jnp.zeros((H, H), jnp.float32)
    whh = jnp.concatenate([
        jnp.concatenate([ri_f, zH, rf_f, zH, ro_f, zH, rg_f, zH], axis=1),
        jnp.concatenate([zH, ri_b, zH, rf_b, zH, ro_b, zH, rg_b], axis=1),
    ], axis=0)                                                  # (2H, 8H) = (32, 128)

    wout = jnp.pad(params["wout"], ((0, 0), (0, OUT_PAD - LABEL_NUM)))   # (2H, 128)

    w_all = jnp.concatenate([wih, whh, wout], axis=0).astype(jnp.bfloat16)  # (192, 128)

    bi_f, bf_f, bg_f, bo_f = _split_gates(params["b_f"])        # each (1, H)
    bi_b, bf_b, bg_b, bo_b = _split_gates(params["b_b"])
    b_gate = jnp.concatenate([bi_f, bi_b, bf_f, bf_b, bo_f, bo_b, bg_f, bg_b],
                             axis=1)                            # (1, 128)
    b_out = jnp.pad(params["bout"], ((0, 0), (0, OUT_PAD - LABEL_NUM)))  # (1, 128)
    b_all = jnp.concatenate([b_gate, b_out], axis=0)            # (2, 128) f32
    return w_all, b_all


# --------------------------------- wrapper ----------------------------------
def sequence_forward(word_inputs, feature_inputs, word_seq_lengths, params):
    """Mirrors Sequence.forward (BiLSTM path); returns (B, S, LABEL_NUM) float32."""
    # WordEmbed glue: embedding gathers + concat (plain JAX, outside the kernel).
    reps = [params["word_emb"][word_inputs]]                    # (B, S, word_dim)
    for idx in range(FEATURE_NUM):
        reps.append(params["feat_embs"][idx][feature_inputs[idx]])
    word_represent = jnp.concatenate(reps, axis=-1).astype(jnp.float32)  # (B, S, D_IN)

    # Pad the batch to BP rows (padded rows get length 0 -> zero LSTM output).
    pad_b = BP - B
    wr = jnp.pad(word_represent, ((0, pad_b), (0, 0), (0, 0)))
    lens = jnp.pad(word_seq_lengths.astype(jnp.int32), (0, pad_b))       # (BP,)

    # Time-major, then forward / time-reversed copies packed side-by-side so each
    # unrolled kernel step reads one contiguous (BP, 8H) row-block of the projection.
    x_tm = jnp.transpose(wr, (1, 0, 2))                         # (S, BP, D_IN)
    x_fwd = x_tm.reshape(S * BP, D_IN)
    x_bwd = x_tm[::-1].reshape(S * BP, D_IN)
    x_sched = jnp.concatenate([x_fwd, x_bwd], axis=-1)          # (S*BP, 2*D_IN)
    x_sched = jnp.pad(x_sched, ((0, 0), (0, IN_PAD - 2 * D_IN))).astype(jnp.bfloat16)

    # Packed-sequence mask, precomputed in the wrapper (no iota / int div in-kernel).
    step_idx = jnp.arange(S, dtype=jnp.int32)
    fwd_m = (step_idx[:, None] < lens[None, :]).astype(jnp.float32)          # (S, BP)
    bwd_m = ((S - 1 - step_idx)[:, None] < lens[None, :]).astype(jnp.float32)
    mask = jnp.concatenate([
        jnp.broadcast_to(fwd_m[:, :, None], (S, BP, H)),
        jnp.broadcast_to(bwd_m[:, :, None], (S, BP, H)),
    ], axis=-1).reshape(S * BP, 2 * H)                          # (S*BP, 2H) f32

    w_all, b_all = _pack_weights(params)

    vmem_spec = pl.BlockSpec(memory_space=pltpu.MemorySpace.VMEM)
    out_flat = pl.pallas_call(
        sequence_kernel,
        out_shape=jax.ShapeDtypeStruct((S * BP, OUT_PAD), jnp.float32),
        in_specs=[vmem_spec] * 4,
        out_specs=vmem_spec,
        scratch_shapes=[pltpu.VMEM((S * BP, 2 * H), jnp.float32)],   # fused fwd|bwd hidden
    )(mask, x_sched, w_all, b_all)

    # (S*BP, 128) -> (S, BP, 128) -> (BP, S, 128) -> slice real batch / labels.
    out = jnp.transpose(out_flat.reshape(S, BP, OUT_PAD), (1, 0, 2))
    return out[:B, :, :LABEL_NUM]                               # droplstm = identity (eval)


# --------------------------- pure-JAX reference ------------------------------
def sequence_reference(word_inputs, feature_inputs, word_seq_lengths, params):
    reps = [params["word_emb"][word_inputs]]
    for idx in range(FEATURE_NUM):
        reps.append(params["feat_embs"][idx][feature_inputs[idx]])
    x = jnp.concatenate(reps, axis=-1).astype(jnp.float32)      # (B, S, D_IN)
    lens = word_seq_lengths.astype(jnp.int32)

    def run_dir(wih, whh, b, reverse):
        h = jnp.zeros((B, H), jnp.float32)
        c = jnp.zeros((B, H), jnp.float32)
        outs = [None] * S
        times = range(S - 1, -1, -1) if reverse else range(S)
        for t in times:
            gates = x[:, t, :] @ wih + h @ whh + b              # (B, 4H) i,f,g,o
            i = jax.nn.sigmoid(gates[:, 0:H])
            f = jax.nn.sigmoid(gates[:, H:2 * H])
            g = jnp.tanh(gates[:, 2 * H:3 * H])
            o = jax.nn.sigmoid(gates[:, 3 * H:4 * H])
            c_new = f * c + i * g
            h_new = o * jnp.tanh(c_new)
            m = (t < lens)[:, None].astype(jnp.float32)
            h = h + m * (h_new - h)
            c = c + m * (c_new - c)
            outs[t] = m * h_new
        return jnp.stack(outs, axis=1)                          # (B, S, H)

    h_f = run_dir(params["wih_f"], params["whh_f"], params["b_f"], False)
    h_b = run_dir(params["wih_b"], params["whh_b"], params["b_b"], True)
    lstm_out = jnp.concatenate([h_f, h_b], axis=-1)             # (B, S, 2H)
    return lstm_out @ params["wout"] + params["bout"]


def init_params(key):
    ks = jax.random.split(key, 12)
    scale = 0.1
    params = {
        "word_emb": scale * jax.random.normal(ks[0], (VOCAB, WORD_EMBED_DIM), jnp.float32),
        "feat_embs": [scale * jax.random.normal(ks[1], (FEAT_VOCAB, FEATURE_EMB_DIMS[0]),
                                                jnp.float32)],
        # LSTM weights stored pre-transposed: (in, 4H) / (H, 4H); PyTorch gate order
        # i,f,g,o (the kernel-layout re-packing happens in _pack_weights).
        "wih_f": scale * jax.random.normal(ks[2], (D_IN, 4 * H), jnp.float32),
        "whh_f": scale * jax.random.normal(ks[3], (H, 4 * H), jnp.float32),
        "b_f":   scale * jax.random.normal(ks[4], (1, 4 * H), jnp.float32),   # b_ih + b_hh
        "wih_b": scale * jax.random.normal(ks[5], (D_IN, 4 * H), jnp.float32),
        "whh_b": scale * jax.random.normal(ks[6], (H, 4 * H), jnp.float32),
        "b_b":   scale * jax.random.normal(ks[7], (1, 4 * H), jnp.float32),
        # hidden2tag: Linear(2H -> LABEL_NUM), stored as (2H, L)
        "wout":  scale * jax.random.normal(ks[8], (2 * H, LABEL_NUM), jnp.float32),
        "bout":  scale * jax.random.normal(ks[9], (1, LABEL_NUM), jnp.float32),
    }
    return params


if __name__ == "__main__":
    key = jax.random.PRNGKey(0)
    kp, kw, kf = jax.random.split(key, 3)

    params = init_params(kp)

    word_inputs = jax.random.randint(kw, (B, S), 0, VOCAB, dtype=jnp.int32)
    feature_inputs = [jax.random.randint(kf, (B, S), 0, FEAT_VOCAB, dtype=jnp.int32)]
    # pack_padded_sequence expects lengths sorted descending; max length == S
    word_seq_lengths = jnp.array([S, 5], dtype=jnp.int32)

    out = sequence_forward(word_inputs, feature_inputs, word_seq_lengths, params)
    out = jax.block_until_ready(out)

    assert out.shape == (B, S, LABEL_NUM)
    assert bool(jnp.all(jnp.isfinite(out)))
    # packed-sequence semantics check: padded positions (batch 1, t >= 5) must equal
    # the hidden2tag bias (pad_packed_sequence zeros -> Linear bias).  Exact: the
    # masked hidden is an exact 0 even with bf16 matmul operands.
    assert bool(jnp.allclose(out[1, 5:, :], params["bout"][0], atol=1e-5))
    # full numerical check against the pure-JAX f32 reference (bf16 MXU operands,
    # f32 accumulation -> loose tolerance).
    ref = sequence_reference(word_inputs, feature_inputs, word_seq_lengths, params)
    assert bool(jnp.allclose(out, ref, atol=1e-2, rtol=0.0))
    print("KERNEL_OK")
</pallas_src>

<mosaic_0001>
module attributes {stable_mosaic.version = 11 : i64} {
  func.func @sequence_kernel(%arg0: memref<64x32xf32, #tpu.memory_space<vmem>>, %arg1: memref<64x128xbf16, #tpu.memory_space<vmem>>, %arg2: memref<192x128xbf16, #tpu.memory_space<vmem>>, %arg3: memref<2x128xf32, #tpu.memory_space<vmem>>, %arg4: memref<64x128xf32, #tpu.memory_space<vmem>>, %arg5: memref<64x32xf32, #tpu.memory_space<vmem>>) attributes {dimension_semantics = [], scalar_prefetch = 0 : i64, scratch_operands = 1 : i64, tpu.core_type = #tpu.core_type<tc>} {
    %c0 = arith.constant 0 : index
    %c0_0 = arith.constant 0 : index
    %0 = vector.load %arg0[%c0, %c0_0] : memref<64x32xf32, #tpu.memory_space<vmem>>, vector<64x32xf32>
    %c0_1 = arith.constant 0 : index
    %c0_2 = arith.constant 0 : index
    %1 = vector.load %arg2[%c0_1, %c0_2] : memref<192x128xbf16, #tpu.memory_space<vmem>>, vector<128x128xbf16>
    %c128 = arith.constant 128 : index
    %c0_3 = arith.constant 0 : index
    %2 = vector.load %arg2[%c128, %c0_3] : memref<192x128xbf16, #tpu.memory_space<vmem>>, vector<32x128xbf16>
    %c160 = arith.constant 160 : index
    %c0_4 = arith.constant 0 : index
    %3 = vector.load %arg2[%c160, %c0_4] : memref<192x128xbf16, #tpu.memory_space<vmem>>, vector<32x128xbf16>
    %c0_5 = arith.constant 0 : index
    %c0_6 = arith.constant 0 : index
    %4 = vector.load %arg3[%c0_5, %c0_6] : memref<2x128xf32, #tpu.memory_space<vmem>>, vector<1x128xf32>
    %c1 = arith.constant 1 : index
    %c0_7 = arith.constant 0 : index
    %5 = vector.load %arg3[%c1, %c0_7] : memref<2x128xf32, #tpu.memory_space<vmem>>, vector<1x128xf32>
    %cst = arith.constant 0.000000e+00 : f32
    %6 = vector.broadcast %cst : f32 to vector<64x32xf32>
    %c0_8 = arith.constant 0 : index
    %c0_9 = arith.constant 0 : index
    %7 = vector.load %arg5[%c0_8, %c0_9] : memref<64x32xf32, #tpu.memory_space<vmem>>, vector<64x32xf32>
    tpu.vector_store %arg5[%c0_8, %c0_9], %6 {strides = array<i32>} : memref<64x32xf32, #tpu.memory_space<vmem>>, vector<64x32xf32>,
    %c0_10 = arith.constant 0 : index
    %c0_11 = arith.constant 0 : index
    %8 = vector.load %arg1[%c0_10, %c0_11] : memref<64x128xbf16, #tpu.memory_space<vmem>>, vector<64x128xbf16>
    %cst_12 = arith.constant dense<0.000000e+00> : vector<64x128xf32>
    %9 = tpu.matmul %8, %1, %cst_12 {dimension_numbers = #tpu.dot_dimension_numbers<[1], [0], [0], [1], [0, 0, 1, 1], [], []>} : vector<64x128xbf16>, vector<128x128xbf16>, vector<64x128xf32> -> vector<64x128xf32>
    %10 = vector.broadcast %4 : vector<1x128xf32> to vector<64x128xf32>
    %11 = arith.addf %9, %10 : vector<64x128xf32>
    %cst_13 = arith.constant 0.000000e+00 : f32
    %12 = vector.broadcast %cst_13 : f32 to vector<8x32xf32>
    %cst_14 = arith.constant 0.000000e+00 : f32
    %13 = vector.broadcast %cst_14 : f32 to vector<8x32xf32>
    %14 = vector.extract_strided_slice %11 {offsets = [0, 0], sizes = [8, 128], strides = [1, 1]} : vector<64x128xf32> to vector<8x128xf32>
    %15 = arith.truncf %12 : vector<8x32xf32> to vector<8x32xbf16>
    %cst_15 = arith.constant dense<0.000000e+00> : vector<8x128xf32>
    %16 = tpu.matmul %15, %2, %cst_15 {dimension_numbers = #tpu.dot_dimension_numbers<[1], [0], [0], [1], [0, 0, 1, 1], [], []>} : vector<8x32xbf16>, vector<32x128xbf16>, vector<8x128xf32> -> vector<8x128xf32>
    %17 = arith.addf %14, %16 : vector<8x128xf32>
    %18 = vector.extract_strided_slice %17 {offsets = [0, 0], sizes = [8, 96], strides = [1, 1]} : vector<8x128xf32> to vector<8x96xf32>
    %19 = arith.negf %18 : vector<8x96xf32>
    %20 = math.exp %19 : vector<8x96xf32>
    %cst_16 = arith.constant 1.000000e+00 : f32
    %21 = vector.broadcast %cst_16 : f32 to vector<8x96xf32>
    %22 = arith.addf %21, %20 : vector<8x96xf32>
    %23 = arith.divf %21, %22 : vector<8x96xf32>
    %24 = vector.extract_strided_slice %17 {offsets = [0, 96], sizes = [8, 32], strides = [1, 1]} : vector<8x128xf32> to vector<8x32xf32>
    %25 = math.tanh %24 : vector<8x32xf32>
    %26 = vector.extract_strided_slice %23 {offsets = [0, 0], sizes = [8, 32], strides = [1, 1]} : vector<8x96xf32> to vector<8x32xf32>
    %27 = vector.extract_strided_slice %23 {offsets = [0, 32], sizes = [8, 32], strides = [1, 1]} : vector<8x96xf32> to vector<8x32xf32>
    %28 = vector.extract_strided_slice %23 {offsets = [0, 64], sizes = [8, 32], strides = [1, 1]} : vector<8x96xf32> to vector<8x32xf32>
    %29 = arith.mulf %27, %13 : vector<8x32xf32>
    %30 = arith.mulf %26, %25 : vector<8x32xf32>
    %31 = arith.addf %29, %30 : vector<8x32xf32>
    %32 = math.tanh %31 : vector<8x32xf32>
    %33 = arith.mulf %28, %32 : vector<8x32xf32>
    %34 = vector.extract_strided_slice %0 {offsets = [0, 0], sizes = [8, 32], strides = [1, 1]} : vector<64x32xf32> to vector<8x32xf32>
    %35 = arith.subf %33, %12 : vector<8x32xf32>
    %36 = arith.mulf %34, %35 : vector<8x32xf32>
    %37 = arith.addf %12, %36 : vector<8x32xf32>
    %38 = arith.subf %31, %13 : vector<8x32xf32>
    %39 = arith.mulf %34, %38 : vector<8x32xf32>
    %40 = arith.addf %13, %39 : vector<8x32xf32>
    %41 = arith.mulf %34, %33 : vector<8x32xf32>
    %42 = vector.extract_strided_slice %41 {offsets = [0, 0], sizes = [8, 16], strides = [1, 1]} : vector<8x32xf32> to vector<8x16xf32>
    %c0_17 = arith.constant 0 : index
    %c0_18 = arith.constant 0 : index
    %43 = vector.load %arg5[%c0_17, %c0_18] : memref<64x32xf32, #tpu.memory_space<vmem>>, vector<8x16xf32>
    tpu.vector_store %arg5[%c0_17, %c0_18], %42 {strides = array<i32>} : memref<64x32xf32, #tpu.memory_space<vmem>>, vector<8x16xf32>,
    %44 = vector.extract_strided_slice %41 {offsets = [0, 16], sizes = [8, 16], strides = [1, 1]} : vector<8x32xf32> to vector<8x16xf32>
    %c56 = arith.constant 56 : index
    %c16 = arith.constant 16 : index
    %45 = vector.load %arg5[%c56, %c16] : memref<64x32xf32, #tpu.memory_space<vmem>>, vector<8x16xf32>
    tpu.vector_store %arg5[%c56, %c16], %44 {strides = array<i32>} : memref<64x32xf32, #tpu.memory_space<vmem>>, vector<8x16xf32>,
    %46 = vector.extract_strided_slice %11 {offsets = [8, 0], sizes = [8, 128], strides = [1, 1]} : vector<64x128xf32> to vector<8x128xf32>
    %47 = arith.truncf %37 : vector<8x32xf32> to vector<8x32xbf16>
    %cst_19 = arith.constant dense<0.000000e+00> : vector<8x128xf32>
    %48 = tpu.matmul %47, %2, %cst_19 {dimension_numbers = #tpu.dot_dimension_numbers<[1], [0], [0], [1], [0, 0, 1, 1], [], []>} : vector<8x32xbf16>, vector<32x128xbf16>, vector<8x128xf32> -> vector<8x128xf32>
    %49 = arith.addf %46, %48 : vector<8x128xf32>
    %50 = vector.extract_strided_slice %49 {offsets = [0, 0], sizes = [8, 96], strides = [1, 1]} : vector<8x128xf32> to vector<8x96xf32>
    %51 = arith.negf %50 : vector<8x96xf32>
    %52 = math.exp %51 : vector<8x96xf32>
    %cst_20 = arith.constant 1.000000e+00 : f32
    %53 = vector.broadcast %cst_20 : f32 to vector<8x96xf32>
    %54 = arith.addf %53, %52 : vector<8x96xf32>
    %55 = arith.divf %53, %54 : vector<8x96xf32>
    %56 = vector.extract_strided_slice %49 {offsets = [0, 96], sizes = [8, 32], strides = [1, 1]} : vector<8x128xf32> to vector<8x32xf32>
    %57 = math.tanh %56 : vector<8x32xf32>
    %58 = vector.extract_strided_slice %55 {offsets = [0, 0], sizes = [8, 32], strides = [1, 1]} : vector<8x96xf32> to vector<8x32xf32>
    %59 = vector.extract_strided_slice %55 {offsets = [0, 32], sizes = [8, 32], strides = [1, 1]} : vector<8x96xf32> to vector<8x32xf32>
    %60 = vector.extract_strided_slice %55 {offsets = [0, 64], sizes = [8, 32], strides = [1, 1]} : vector<8x96xf32> to vector<8x32xf32>
    %61 = arith.mulf %59, %40 : vector<8x32xf32>
    %62 = arith.mulf %58, %57 : vector<8x32xf32>
    %63 = arith.addf %61, %62 : vector<8x32xf32>
    %64 = math.tanh %63 : vector<8x32xf32>
    %65 = arith.mulf %60, %64 : vector<8x32xf32>
    %66 = vector.extract_strided_slice %0 {offsets = [8, 0], sizes = [8, 32], strides = [1, 1]} : vector<64x32xf32> to vector<8x32xf32>
    %67 = arith.subf %65, %37 : vector<8x32xf32>
    %68 = arith.mulf %66, %67 : vector<8x32xf32>
    %69 = arith.addf %37, %68 : vector<8x32xf32>
    %70 = arith.subf %63, %40 : vector<8x32xf32>
    %71 = arith.mulf %66, %70 : vector<8x32xf32>
    %72 = arith.addf %40, %71 : vector<8x32xf32>
    %73 = arith.mulf %66, %65 : vector<8x32xf32>
    %74 = vector.extract_strided_slice %73 {offsets = [0, 0], sizes = [8, 16], strides = [1, 1]} : vector<8x32xf32> to vector<8x16xf32>
    %c8 = arith.constant 8 : index
    %c0_21 = arith.constant 0 : index
    %75 = vector.load %arg5[%c8, %c0_21] : memref<64x32xf32, #tpu.memory_space<vmem>>, vector<8x16xf32>
    tpu.vector_store %arg5[%c8, %c0_21], %74 {strides = array<i32>} : memref<64x32xf32, #tpu.memory_space<vmem>>, vector<8x16xf32>,
    %76 = vector.extract_strided_slice %73 {offsets = [0, 16], sizes = [8, 16], strides = [1, 1]} : vector<8x32xf32> to vector<8x16xf32>
    %c48 = arith.constant 48 : index
    %c16_22 = arith.constant 16 : index
    %77 = vector.load %arg5[%c48, %c16_22] : memref<64x32xf32, #tpu.memory_space<vmem>>, vector<8x16xf32>
    tpu.vector_store %arg5[%c48, %c16_22], %76 {strides = array<i32>} : memref<64x32xf32, #tpu.memory_space<vmem>>, vector<8x16xf32>,
    %78 = vector.extract_strided_slice %11 {offsets = [16, 0], sizes = [8, 128], strides = [1, 1]} : vector<64x128xf32> to vector<8x128xf32>
    %79 = arith.truncf %69 : vector<8x32xf32> to vector<8x32xbf16>
    %cst_23 = arith.constant dense<0.000000e+00> : vector<8x128xf32>
    %80 = tpu.matmul %79, %2, %cst_23 {dimension_numbers = #tpu.dot_dimension_numbers<[1], [0], [0], [1], [0, 0, 1, 1], [], []>} : vector<8x32xbf16>, vector<32x128xbf16>, vector<8x128xf32> -> vector<8x128xf32>
    %81 = arith.addf %78, %80 : vector<8x128xf32>
    %82 = vector.extract_strided_slice %81 {offsets = [0, 0], sizes = [8, 96], strides = [1, 1]} : vector<8x128xf32> to vector<8x96xf32>
    %83 = arith.negf %82 : vector<8x96xf32>
    %84 = math.exp %83 : vector<8x96xf32>
    %cst_24 = arith.constant 1.000000e+00 : f32
    %85 = vector.broadcast %cst_24 : f32 to vector<8x96xf32>
    %86 = arith.addf %85, %84 : vector<8x96xf32>
    %87 = arith.divf %85, %86 : vector<8x96xf32>
    %88 = vector.extract_strided_slice %81 {offsets = [0, 96], sizes = [8, 32], strides = [1, 1]} : vector<8x128xf32> to vector<8x32xf32>
    %89 = math.tanh %88 : vector<8x32xf32>
    %90 = vector.extract_strided_slice %87 {offsets = [0, 0], sizes = [8, 32], strides = [1, 1]} : vector<8x96xf32> to vector<8x32xf32>
    %91 = vector.extract_strided_slice %87 {offsets = [0, 32], sizes = [8, 32], strides = [1, 1]} : vector<8x96xf32> to vector<8x32xf32>
    %92 = vector.extract_strided_slice %87 {offsets = [0, 64], sizes = [8, 32], strides = [1, 1]} : vector<8x96xf32> to vector<8x32xf32>
    %93 = arith.mulf %91, %72 : vector<8x32xf32>
    %94 = arith.mulf %90, %89 : vector<8x32xf32>
    %95 = arith.addf %93, %94 : vector<8x32xf32>
    %96 = math.tanh %95 : vector<8x32xf32>
    %97 = arith.mulf %92, %96 : vector<8x32xf32>
    %98 = vector.extract_strided_slice %0 {offsets = [16, 0], sizes = [8, 32], strides = [1, 1]} : vector<64x32xf32> to vector<8x32xf32>
    %99 = arith.subf %97, %69 : vector<8x32xf32>
    %100 = arith.mulf %98, %99 : vector<8x32xf32>
    %101 = arith.addf %69, %100 : vector<8x32xf32>
    %102 = arith.subf %95, %72 : vector<8x32xf32>
    %103 = arith.mulf %98, %102 : vector<8x32xf32>
    %104 = arith.addf %72, %103 : vector<8x32xf32>
    %105 = arith.mulf %98, %97 : vector<8x32xf32>
    %106 = vector.extract_strided_slice %105 {offsets = [0, 0], sizes = [8, 16], strides = [1, 1]} : vector<8x32xf32> to vector<8x16xf32>
    %c16_25 = arith.constant 16 : index
    %c0_26 = arith.constant 0 : index
    %107 = vector.load %arg5[%c16_25, %c0_26] : memref<64x32xf32, #tpu.memory_space<vmem>>, vector<8x16xf32>
    tpu.vector_store %arg5[%c16_25, %c0_26], %106 {strides = array<i32>} : memref<64x32xf32, #tpu.memory_space<vmem>>, vector<8x16xf32>,
    %108 = vector.extract_strided_slice %105 {offsets = [0, 16], sizes = [8, 16], strides = [1, 1]} : vector<8x32xf32> to vector<8x16xf32>
    %c40 = arith.constant 40 : index
    %c16_27 = arith.constant 16 : index
    %109 = vector.load %arg5[%c40, %c16_27] : memref<64x32xf32, #tpu.memory_space<vmem>>, vector<8x16xf32>
    tpu.vector_store %arg5[%c40, %c16_27], %108 {strides = array<i32>} : memref<64x32xf32, #tpu.memory_space<vmem>>, vector<8x16xf32>,
    %110 = vector.extract_strided_slice %11 {offsets = [24, 0], sizes = [8, 128], strides = [1, 1]} : vector<64x128xf32> to vector<8x128xf32>
    %111 = arith.truncf %101 : vector<8x32xf32> to vector<8x32xbf16>
    %cst_28 = arith.constant dense<0.000000e+00> : vector<8x128xf32>
    %112 = tpu.matmul %111, %2, %cst_28 {dimension_numbers = #tpu.dot_dimension_numbers<[1], [0], [0], [1], [0, 0, 1, 1], [], []>} : vector<8x32xbf16>, vector<32x128xbf16>, vector<8x128xf32> -> vector<8x128xf32>
    %113 = arith.addf %110, %112 : vector<8x128xf32>
    %114 = vector.extract_strided_slice %113 {offsets = [0, 0], sizes = [8, 96], strides = [1, 1]} : vector<8x128xf32> to vector<8x96xf32>
    %115 = arith.negf %114 : vector<8x96xf32>
    %116 = math.exp %115 : vector<8x96xf32>
    %cst_29 = arith.constant 1.000000e+00 : f32
    %117 = vector.broadcast %cst_29 : f32 to vector<8x96xf32>
    %118 = arith.addf %117, %116 : vector<8x96xf32>
    %119 = arith.divf %117, %118 : vector<8x96xf32>
    %120 = vector.extract_strided_slice %113 {offsets = [0, 96], sizes = [8, 32], strides = [1, 1]} : vector<8x128xf32> to vector<8x32xf32>
    %121 = math.tanh %120 : vector<8x32xf32>
    %122 = vector.extract_strided_slice %119 {offsets = [0, 0], sizes = [8, 32], strides = [1, 1]} : vector<8x96xf32> to vector<8x32xf32>
    %123 = vector.extract_strided_slice %119 {offsets = [0, 32], sizes = [8, 32], strides = [1, 1]} : vector<8x96xf32> to vector<8x32xf32>
    %124 = vector.extract_strided_slice %119 {offsets = [0, 64], sizes = [8, 32], strides = [1, 1]} : vector<8x96xf32> to vector<8x32xf32>
    %125 = arith.mulf %123, %104 : vector<8x32xf32>
    %126 = arith.mulf %122, %121 : vector<8x32xf32>
    %127 = arith.addf %125, %126 : vector<8x32xf32>
    %128 = math.tanh %127 : vector<8x32xf32>
    %129 = arith.mulf %124, %128 : vector<8x32xf32>
    %130 = vector.extract_strided_slice %0 {offsets = [24, 0], sizes = [8, 32], strides = [1, 1]} : vector<64x32xf32> to vector<8x32xf32>
    %131 = arith.subf %129, %101 : vector<8x32xf32>
    %132 = arith.mulf %130, %131 : vector<8x32xf32>
    %133 = arith.addf %101, %132 : vector<8x32xf32>
    %134 = arith.subf %127, %104 : vector<8x32xf32>
    %135 = arith.mulf %130, %134 : vector<8x32xf32>
    %136 = arith.addf %104, %135 : vector<8x32xf32>
    %137 = arith.mulf %130, %129 : vector<8x32xf32>
    %138 = vector.extract_strided_slice %137 {offsets = [0, 0], sizes = [8, 16], strides = [1, 1]} : vector<8x32xf32> to vector<8x16xf32>
    %c24 = arith.constant 24 : index
    %c0_30 = arith.constant 0 : index
    %139 = vector.load %arg5[%c24, %c0_30] : memref<64x32xf32, #tpu.memory_space<vmem>>, vector<8x16xf32>
    tpu.vector_store %arg5[%c24, %c0_30], %138 {strides = array<i32>} : memref<64x32xf32, #tpu.memory_space<vmem>>, vector<8x16xf32>,
    %140 = vector.extract_strided_slice %137 {offsets = [0, 16], sizes = [8, 16], strides = [1, 1]} : vector<8x32xf32> to vector<8x16xf32>
    %c32 = arith.constant 32 : index
    %c16_31 = arith.constant 16 : index
    %141 = vector.load %arg5[%c32, %c16_31] : memref<64x32xf32, #tpu.memory_space<vmem>>, vector<8x16xf32>
    tpu.vector_store %arg5[%c32, %c16_31], %140 {strides = array<i32>} : memref<64x32xf32, #tpu.memory_space<vmem>>, vector<8x16xf32>,
    %142 = vector.extract_strided_slice %11 {offsets = [32, 0], sizes = [8, 128], strides = [1, 1]} : vector<64x128xf32> to vector<8x128xf32>
    %143 = arith.truncf %133 : vector<8x32xf32> to vector<8x32xbf16>
    %cst_32 = arith.constant dense<0.000000e+00> : vector<8x128xf32>
    %144 = tpu.matmul %143, %2, %cst_32 {dimension_numbers = #tpu.dot_dimension_numbers<[1], [0], [0], [1], [0, 0, 1, 1], [], []>} : vector<8x32xbf16>, vector<32x128xbf16>, vector<8x128xf32> -> vector<8x128xf32>
    %145 = arith.addf %142, %144 : vector<8x128xf32>
    %146 = vector.extract_strided_slice %145 {offsets = [0, 0], sizes = [8, 96], strides = [1, 1]} : vector<8x128xf32> to vector<8x96xf32>
    %147 = arith.negf %146 : vector<8x96xf32>
    %148 = math.exp %147 : vector<8x96xf32>
    %cst_33 = arith.constant 1.000000e+00 : f32
    %149 = vector.broadcast %cst_33 : f32 to vector<8x96xf32>
    %150 = arith.addf %149, %148 : vector<8x96xf32>
    %151 = arith.divf %149, %150 : vector<8x96xf32>
    %152 = vector.extract_strided_slice %145 {offsets = [0, 96], sizes = [8, 32], strides = [1, 1]} : vector<8x128xf32> to vector<8x32xf32>
    %153 = math.tanh %152 : vector<8x32xf32>
    %154 = vector.extract_strided_slice %151 {offsets = [0, 0], sizes = [8, 32], strides = [1, 1]} : vector<8x96xf32> to vector<8x32xf32>
    %155 = vector.extract_strided_slice %151 {offsets = [0, 32], sizes = [8, 32], strides = [1, 1]} : vector<8x96xf32> to vector<8x32xf32>
    %156 = vector.extract_strided_slice %151 {offsets = [0, 64], sizes = [8, 32], strides = [1, 1]} : vector<8x96xf32> to vector<8x32xf32>
    %157 = arith.mulf %155, %136 : vector<8x32xf32>
    %158 = arith.mulf %154, %153 : vector<8x32xf32>
    %159 = arith.addf %157, %158 : vector<8x32xf32>
    %160 = math.tanh %159 : vector<8x32xf32>
    %161 = arith.mulf %156, %160 : vector<8x32xf32>
    %162 = vector.extract_strided_slice %0 {offsets = [32, 0], sizes = [8, 32], strides = [1, 1]} : vector<64x32xf32> to vector<8x32xf32>
    %163 = arith.subf %161, %133 : vector<8x32xf32>
    %164 = arith.mulf %162, %163 : vector<8x32xf32>
    %165 = arith.addf %133, %164 : vector<8x32xf32>
    %166 = arith.subf %159, %136 : vector<8x32xf32>
    %167 = arith.mulf %162, %166 : vector<8x32xf32>
    %168 = arith.addf %136, %167 : vector<8x32xf32>
    %169 = arith.mulf %162, %161 : vector<8x32xf32>
    %170 = vector.extract_strided_slice %169 {offsets = [0, 0], sizes = [8, 16], strides = [1, 1]} : vector<8x32xf32> to vector<8x16xf32>
    %c32_34 = arith.constant 32 : index
    %c0_35 = arith.constant 0 : index
    %171 = vector.load %arg5[%c32_34, %c0_35] : memref<64x32xf32, #tpu.memory_space<vmem>>, vector<8x16xf32>
    tpu.vector_store %arg5[%c32_34, %c0_35], %170 {strides = array<i32>} : memref<64x32xf32, #tpu.memory_space<vmem>>, vector<8x16xf32>,
    %172 = vector.extract_strided_slice %169 {offsets = [0, 16], sizes = [8, 16], strides = [1, 1]} : vector<8x32xf32> to vector<8x16xf32>
    %c24_36 = arith.constant 24 : index
    %c16_37 = arith.constant 16 : index
    %173 = vector.load %arg5[%c24_36, %c16_37] : memref<64x32xf32, #tpu.memory_space<vmem>>, vector<8x16xf32>
    tpu.vector_store %arg5[%c24_36, %c16_37], %172 {strides = array<i32>} : memref<64x32xf32, #tpu.memory_space<vmem>>, vector<8x16xf32>,
    %174 = vector.extract_strided_slice %11 {offsets = [40, 0], sizes = [8, 128], strides = [1, 1]} : vector<64x128xf32> to vector<8x128xf32>
    %175 = arith.truncf %165 : vector<8x32xf32> to vector<8x32xbf16>
    %cst_38 = arith.constant dense<0.000000e+00> : vector<8x128xf32>
    %176 = tpu.matmul %175, %2, %cst_38 {dimension_numbers = #tpu.dot_dimension_numbers<[1], [0], [0], [1], [0, 0, 1, 1], [], []>} : vector<8x32xbf16>, vector<32x128xbf16>, vector<8x128xf32> -> vector<8x128xf32>
    %177 = arith.addf %174, %176 : vector<8x128xf32>
    %178 = vector.extract_strided_slice %177 {offsets = [0, 0], sizes = [8, 96], strides = [1, 1]} : vector<8x128xf32> to vector<8x96xf32>
    %179 = arith.negf %178 : vector<8x96xf32>
    %180 = math.exp %179 : vector<8x96xf32>
    %cst_39 = arith.constant 1.000000e+00 : f32
    %181 = vector.broadcast %cst_39 : f32 to vector<8x96xf32>
    %182 = arith.addf %181, %180 : vector<8x96xf32>
    %183 = arith.divf %181, %182 : vector<8x96xf32>
    %184 = vector.extract_strided_slice %177 {offsets = [0, 96], sizes = [8, 32], strides = [1, 1]} : vector<8x128xf32> to vector<8x32xf32>
    %185 = math.tanh %184 : vector<8x32xf32>
    %186 = vector.extract_strided_slice %183 {offsets = [0, 0], sizes = [8, 32], strides = [1, 1]} : vector<8x96xf32> to vector<8x32xf32>
    %187 = vector.extract_strided_slice %183 {offsets = [0, 32], sizes = [8, 32], strides = [1, 1]} : vector<8x96xf32> to vector<8x32xf32>
    %188 = vector.extract_strided_slice %183 {offsets = [0, 64], sizes = [8, 32], strides = [1, 1]} : vector<8x96xf32> to vector<8x32xf32>
    %189 = arith.mulf %187, %168 : vector<8x32xf32>
    %190 = arith.mulf %186, %185 : vector<8x32xf32>
    %191 = arith.addf %189, %190 : vector<8x32xf32>
    %192 = math.tanh %191 : vector<8x32xf32>
    %193 = arith.mulf %188, %192 : vector<8x32xf32>
    %194 = vector.extract_strided_slice %0 {offsets = [40, 0], sizes = [8, 32], strides = [1, 1]} : vector<64x32xf32> to vector<8x32xf32>
    %195 = arith.subf %193, %165 : vector<8x32xf32>
    %196 = arith.mulf %194, %195 : vector<8x32xf32>
    %197 = arith.addf %165, %196 : vector<8x32xf32>
    %198 = arith.subf %191, %168 : vector<8x32xf32>
    %199 = arith.mulf %194, %198 : vector<8x32xf32>
    %200 = arith.addf %168, %199 : vector<8x32xf32>
    %201 = arith.mulf %194, %193 : vector<8x32xf32>
    %202 = vector.extract_strided_slice %201 {offsets = [0, 0], sizes = [8, 16], strides = [1, 1]} : vector<8x32xf32> to vector<8x16xf32>
    %c40_40 = arith.constant 40 : index
    %c0_41 = arith.constant 0 : index
    %203 = vector.load %arg5[%c40_40, %c0_41] : memref<64x32xf32, #tpu.memory_space<vmem>>, vector<8x16xf32>
    tpu.vector_store %arg5[%c40_40, %c0_41], %202 {strides = array<i32>} : memref<64x32xf32, #tpu.memory_space<vmem>>, vector<8x16xf32>,
    %204 = vector.extract_strided_slice %201 {offsets = [0, 16], sizes = [8, 16], strides = [1, 1]} : vector<8x32xf32> to vector<8x16xf32>
    %c16_42 = arith.constant 16 : index
    %c16_43 = arith.constant 16 : index
    %205 = vector.load %arg5[%c16_42, %c16_43] : memref<64x32xf32, #tpu.memory_space<vmem>>, vector<8x16xf32>
    tpu.vector_store %arg5[%c16_42, %c16_43], %204 {strides = array<i32>} : memref<64x32xf32, #tpu.memory_space<vmem>>, vector<8x16xf32>,
    %206 = vector.extract_strided_slice %11 {offsets = [48, 0], sizes = [8, 128], strides = [1, 1]} : vector<64x128xf32> to vector<8x128xf32>
    %207 = arith.truncf %197 : vector<8x32xf32> to vector<8x32xbf16>
    %cst_44 = arith.constant dense<0.000000e+00> : vector<8x128xf32>
    %208 = tpu.matmul %207, %2, %cst_44 {dimension_numbers = #tpu.dot_dimension_numbers<[1], [0], [0], [1], [0, 0, 1, 1], [], []>} : vector<8x32xbf16>, vector<32x128xbf16>, vector<8x128xf32> -> vector<8x128xf32>
    %209 = arith.addf %206, %208 : vector<8x128xf32>
    %210 = vector.extract_strided_slice %209 {offsets = [0, 0], sizes = [8, 96], strides = [1, 1]} : vector<8x128xf32> to vector<8x96xf32>
    %211 = arith.negf %210 : vector<8x96xf32>
    %212 = math.exp %211 : vector<8x96xf32>
    %cst_45 = arith.constant 1.000000e+00 : f32
    %213 = vector.broadcast %cst_45 : f32 to vector<8x96xf32>
    %214 = arith.addf %213, %212 : vector<8x96xf32>
    %215 = arith.divf %213, %214 : vector<8x96xf32>
    %216 = vector.extract_strided_slice %209 {offsets = [0, 96], sizes = [8, 32], strides = [1, 1]} : vector<8x128xf32> to vector<8x32xf32>
    %217 = math.tanh %216 : vector<8x32xf32>
    %218 = vector.extract_strided_slice %215 {offsets = [0, 0], sizes = [8, 32], strides = [1, 1]} : vector<8x96xf32> to vector<8x32xf32>
    %219 = vector.extract_strided_slice %215 {offsets = [0, 32], sizes = [8, 32], strides = [1, 1]} : vector<8x96xf32> to vector<8x32xf32>
    %220 = vector.extract_strided_slice %215 {offsets = [0, 64], sizes = [8, 32], strides = [1, 1]} : vector<8x96xf32> to vector<8x32xf32>
    %221 = arith.mulf %219, %200 : vector<8x32xf32>
    %222 = arith.mulf %218, %217 : vector<8x32xf32>
    %223 = arith.addf %221, %222 : vector<8x32xf32>
    %224 = math.tanh %223 : vector<8x32xf32>
    %225 = arith.mulf %220, %224 : vector<8x32xf32>
    %226 = vector.extract_strided_slice %0 {offsets = [48, 0], sizes = [8, 32], strides = [1, 1]} : vector<64x32xf32> to vector<8x32xf32>
    %227 = arith.subf %225, %197 : vector<8x32xf32>
    %228 = arith.mulf %226, %227 : vector<8x32xf32>
    %229 = arith.addf %197, %228 : vector<8x32xf32>
    %230 = arith.subf %223, %200 : vector<8x32xf32>
    %231 = arith.mulf %226, %230 : vector<8x32xf32>
    %232 = arith.addf %200, %231 : vector<8x32xf32>
    %233 = arith.mulf %226, %225 : vector<8x32xf32>
    %234 = vector.extract_strided_slice %233 {offsets = [0, 0], sizes = [8, 16], strides = [1, 1]} : vector<8x32xf32> to vector<8x16xf32>
    %c48_46 = arith.constant 48 : index
    %c0_47 = arith.constant 0 : index
    %235 = vector.load %arg5[%c48_46, %c0_47] : memref<64x32xf32, #tpu.memory_space<vmem>>, vector<8x16xf32>
    tpu.vector_store %arg5[%c48_46, %c0_47], %234 {strides = array<i32>} : memref<64x32xf32, #tpu.memory_space<vmem>>, vector<8x16xf32>,
    %236 = vector.extract_strided_slice %233 {offsets = [0, 16], sizes = [8, 16], strides = [1, 1]} : vector<8x32xf32> to vector<8x16xf32>
    %c8_48 = arith.constant 8 : index
    %c16_49 = arith.constant 16 : index
    %237 = vector.load %arg5[%c8_48, %c16_49] : memref<64x32xf32, #tpu.memory_space<vmem>>, vector<8x16xf32>
    tpu.vector_store %arg5[%c8_48, %c16_49], %236 {strides = array<i32>} : memref<64x32xf32, #tpu.memory_space<vmem>>, vector<8x16xf32>,
    %238 = vector.extract_strided_slice %11 {offsets = [56, 0], sizes = [8, 128], strides = [1, 1]} : vector<64x128xf32> to vector<8x128xf32>
    %239 = arith.truncf %229 : vector<8x32xf32> to vector<8x32xbf16>
    %cst_50 = arith.constant dense<0.000000e+00> : vector<8x128xf32>
    %240 = tpu.matmul %239, %2, %cst_50 {dimension_numbers = #tpu.dot_dimension_numbers<[1], [0], [0], [1], [0, 0, 1, 1], [], []>} : vector<8x32xbf16>, vector<32x128xbf16>, vector<8x128xf32> -> vector<8x128xf32>
    %241 = arith.addf %238, %240 : vector<8x128xf32>
    %242 = vector.extract_strided_slice %241 {offsets = [0, 0], sizes = [8, 96], strides = [1, 1]} : vector<8x128xf32> to vector<8x96xf32>
    %243 = arith.negf %242 : vector<8x96xf32>
    %244 = math.exp %243 : vector<8x96xf32>
    %cst_51 = arith.constant 1.000000e+00 : f32
    %245 = vector.broadcast %cst_51 : f32 to vector<8x96xf32>
    %246 = arith.addf %245, %244 : vector<8x96xf32>
    %247 = arith.divf %245, %246 : vector<8x96xf32>
    %248 = vector.extract_strided_slice %241 {offsets = [0, 96], sizes = [8, 32], strides = [1, 1]} : vector<8x128xf32> to vector<8x32xf32>
    %249 = math.tanh %248 : vector<8x32xf32>
    %250 = vector.extract_strided_slice %247 {offsets = [0, 0], sizes = [8, 32], strides = [1, 1]} : vector<8x96xf32> to vector<8x32xf32>
    %251 = vector.extract_strided_slice %247 {offsets = [0, 32], sizes = [8, 32], strides = [1, 1]} : vector<8x96xf32> to vector<8x32xf32>
    %252 = vector.extract_strided_slice %247 {offsets = [0, 64], sizes = [8, 32], strides = [1, 1]} : vector<8x96xf32> to vector<8x32xf32>
    %253 = arith.mulf %251, %232 : vector<8x32xf32>
    %254 = arith.mulf %250, %249 : vector<8x32xf32>
    %255 = arith.addf %253, %254 : vector<8x32xf32>
    %256 = math.tanh %255 : vector<8x32xf32>
    %257 = arith.mulf %252, %256 : vector<8x32xf32>
    %258 = vector.extract_strided_slice %0 {offsets = [56, 0], sizes = [8, 32], strides = [1, 1]} : vector<64x32xf32> to vector<8x32xf32>
    %259 = arith.mulf %258, %257 : vector<8x32xf32>
    %260 = vector.extract_strided_slice %259 {offsets = [0, 0], sizes = [8, 16], strides = [1, 1]} : vector<8x32xf32> to vector<8x16xf32>
    %c56_52 = arith.constant 56 : index
    %c0_53 = arith.constant 0 : index
    %261 = vector.load %arg5[%c56_52, %c0_53] : memref<64x32xf32, #tpu.memory_space<vmem>>, vector<8x16xf32>
    tpu.vector_store %arg5[%c56_52, %c0_53], %260 {strides = array<i32>} : memref<64x32xf32, #tpu.memory_space<vmem>>, vector<8x16xf32>,
    %262 = vector.extract_strided_slice %259 {offsets = [0, 16], sizes = [8, 16], strides = [1, 1]} : vector<8x32xf32> to vector<8x16xf32>
    %c0_54 = arith.constant 0 : index
    %c16_55 = arith.constant 16 : index
    %263 = vector.load %arg5[%c0_54, %c16_55] : memref<64x32xf32, #tpu.memory_space<vmem>>, vector<8x16xf32>
    tpu.vector_store %arg5[%c0_54, %c16_55], %262 {strides = array<i32>} : memref<64x32xf32, #tpu.memory_space<vmem>>, vector<8x16xf32>,
    %c0_56 = arith.constant 0 : index
    %c0_57 = arith.constant 0 : index
    %264 = vector.load %arg5[%c0_56, %c0_57] : memref<64x32xf32, #tpu.memory_space<vmem>>, vector<64x32xf32>
    %265 = arith.truncf %264 : vector<64x32xf32> to vector<64x32xbf16>
    %cst_58 = arith.constant dense<0.000000e+00> : vector<64x128xf32>
    %266 = tpu.matmul %265, %3, %cst_58 {dimension_numbers = #tpu.dot_dimension_numbers<[1], [0], [0], [1], [0, 0, 1, 1], [], []>} : vector<64x32xbf16>, vector<32x128xbf16>, vector<64x128xf32> -> vector<64x128xf32>
    %267 = vector.broadcast %5 : vector<1x128xf32> to vector<64x128xf32>
    %268 = arith.addf %266, %267 : vector<64x128xf32>
    %c0_59 = arith.constant 0 : index
    %c0_60 = arith.constant 0 : index
    %269 = vector.load %arg4[%c0_59, %c0_60] : memref<64x128xf32, #tpu.memory_space<vmem>>, vector<64x128xf32>
    tpu.vector_store %arg4[%c0_59, %c0_60], %268 {strides = array<i32>} : memref<64x128xf32, #tpu.memory_space<vmem>>, vector<64x128xf32>,
    return
  }
}

</mosaic_0001>

<llo_original>
// kernel: tpu_custom_call.1
$region0: #{tpu_custom_call.1}
  #allocation0 [shape = 'u32[]', space=smem, size = 0x4, offset = 0x4, fixed_abs, tag = 'smem constant byte address 0x4 - core index']
  #allocation1 [shape = 'u32[144,128]{1,0:T(1,128)}', space=vmem, size = 0x12000, scoped, tag = 'internal scratch']
  #allocation2 [shape = 'f32[64,32]{1,0:T(8,128)}', space=vmem, size = 0x8000, scoped, tag = 'scratch operand']
  %s0 = inlined_call_operand.vmem [shape: f32[64,32], index: 0, kind: input, shape index: {}]
  %s1 = inlined_call_operand.hbm [shape: bf16[64,128], index: 1, kind: input, shape index: {}]
  %s2 = inlined_call_operand.vmem [shape: bf16[192,128], index: 2, kind: input, shape index: {}]
  %s3 = inlined_call_operand.vmem [shape: f32[2,128], index: 3, kind: input, shape index: {}]
  %s4 = inlined_call_operand.hbm [shape: f32[64,128], index: 4, kind: output, shape index: {}]
  %s5 = sld [smem:[#allocation0]]
  $region30: #{tpu_custom_call.1} parent=0
    _
  %s7 = ssub.s32 1, %s5
  %s8 = scalar_select 0, %s7, %s5
  $region1: #{tpu_custom_call.1} parent=0
    #allocation3 [shape = 'u8[16384]{0}', space=vmem, size = 0x4000, scoped, tag = 'input window, operand 1, single buffered']
    #allocation4 [shape = 's32[1]{0}', space=sflag, size = 0x4, scoped, tag = 'scoped memory for tpu_custom_call.1']
    #allocation5 [shape = 's32[1]{0}', space=sflag, size = 0x4, scoped, tag = 'scoped memory for tpu_custom_call.1']
    #allocation6 [shape = 'u8[32768]{0}', space=vmem, size = 0x8000, scoped, tag = 'output window, operand 0, single buffered']
    %9 = vsyncpa [#allocation4], 0
    %10 = vsyncpa [#allocation5], 0
    // Predicated region
    $region2: #{tpu_custom_call.1} parent=1 // pred_check
      _
    $region3: #{tpu_custom_call.1} parent=1 // pred_check_branch
      %12 = sbr.rel (0) target = $region5
    $region4: #{tpu_custom_call.1} parent=1 // pred_region
      _
    $region5: #{tpu_custom_call.1} parent=1 // pred_fallthru
      _
    // Predicated region
    $region6: #{tpu_custom_call.1} parent=1 // pred_check
      _
    $region7: #{tpu_custom_call.1} parent=1 // pred_check_branch
      %14 = sbr.rel (0) target = $region9
    $region8: #{tpu_custom_call.1} parent=1 // pred_region
      %s16 = ssub.s32 512, 512
      %17 = vsyncadd [#allocation4], %s16
      %s18 = sshll.u32 [#allocation3], 4
      %s19 = int_to_ptr.vmem [resolvable:$true] %s18
      %24 = dma.hbm_to_vmem [thread:$0]  %s1, 512, %s19, [#allocation4], 64, 64, 4
    $region9: #{tpu_custom_call.1} parent=1 // pred_fallthru
      _
    // Predicated region
    $region10: #{tpu_custom_call.1} parent=1 // pred_check
      _
    $region11: #{tpu_custom_call.1} parent=1 // pred_check_branch
      %26 = sbr.rel (0) target = $region13
    $region12: #{tpu_custom_call.1} parent=1 // pred_region
      _
    $region13: #{tpu_custom_call.1} parent=1 // pred_fallthru
      _
    // Predicated region
    $region14: #{tpu_custom_call.1} parent=1 // pred_check
      _
    $region15: #{tpu_custom_call.1} parent=1 // pred_check_branch
      %28 = sbr.rel (0) target = $region17
    $region16: #{tpu_custom_call.1} parent=1 // pred_region
      _
    $region17: #{tpu_custom_call.1} parent=1 // pred_fallthru
      _
    // Predicated region
    $region18: #{tpu_custom_call.1} parent=1 // pred_check
      _
    $region19: #{tpu_custom_call.1} parent=1 // pred_check_branch
      %30 = sbr.rel (0) target = $region21
    $region20: #{tpu_custom_call.1} parent=1 // pred_region
      %31 = dma.done [#allocation4], 512
    $region21: #{tpu_custom_call.1} parent=1 // pred_fallthru
      _
    %v33 = vld [vmem:[%s0] sm:$0xff]
    %v34 = vld [vmem:[%s0 + $0x8] sm:$0xff]
    %v35 = vld [vmem:[%s0 + $0x10] sm:$0xff]
    %v36 = vld [vmem:[%s0 + $0x18] sm:$0xff]
    %v37 = vld [vmem:[%s0 + $0x20] sm:$0xff]
    %v38 = vld [vmem:[%s0 + $0x28] sm:$0xff]
    %v39 = vld [vmem:[%s0 + $0x30] sm:$0xff]
    %v40 = vld [vmem:[%s0 + $0x38] sm:$0xff]
    %v41 = vld [vmem:[%s2] sm:$0xf]
    %v42 = vld [vmem:[%s2 + $0x4] sm:$0xf]
    %v43 = vld [vmem:[%s2 + $0x8] sm:$0xf]
    %v44 = vld [vmem:[%s2 + $0xc] sm:$0xf]
    %v45 = vld [vmem:[%s2 + $0x10] sm:$0xf]
    %v46 = vld [vmem:[%s2 + $0x14] sm:$0xf]
    %v47 = vld [vmem:[%s2 + $0x18] sm:$0xf]
    %v48 = vld [vmem:[%s2 + $0x1c] sm:$0xf]
    %v49 = vld [vmem:[%s2 + $0x20] sm:$0xf]
    %v50 = vld [vmem:[%s2 + $0x24] sm:$0xf]
    %v51 = vld [vmem:[%s2 + $0x28] sm:$0xf]
    %v52 = vld [vmem:[%s2 + $0x2c] sm:$0xf]
    %v53 = vld [vmem:[%s2 + $0x30] sm:$0xf]
    %v54 = vld [vmem:[%s2 + $0x34] sm:$0xf]
    %v55 = vld [vmem:[%s2 + $0x38] sm:$0xf]
    %v56 = vld [vmem:[%s2 + $0x3c] sm:$0xf]
    %v57 = vld [vmem:[%s2 + $0x40] sm:$0xf]
    %v58 = vld [vmem:[%s2 + $0x44] sm:$0xf]
    %v59 = vld [vmem:[%s2 + $0x48] sm:$0xf]
    %v60 = vld [vmem:[%s2 + $0x4c] sm:$0xf]
    %v61 = vld [vmem:[%s2 + $0x50] sm:$0xf]
    %v62 = vld [vmem:[%s2 + $0x54] sm:$0xf]
    %v63 = vld [vmem:[%s2 + $0x58] sm:$0xf]
    %v64 = vld [vmem:[%s2 + $0x5c] sm:$0xf]
    %v65 = vld [vmem:[%s3] sm:$0x1]
    %v66 = vld [vmem:[%s3 + $0x1] sm:$0x1]
    %vm67 = vcmask 261120
    %68 = vst.msk [vmem:[#allocation2] sm:$0xff] %vm67, 0.0
    %69 = vst.msk [vmem:[#allocation2 + $0x8] sm:$0xff] %vm67, 0.0
    %70 = vst.msk [vmem:[#allocation2 + $0x10] sm:$0xff] %vm67, 0.0
    %71 = vst.msk [vmem:[#allocation2 + $0x18] sm:$0xff] %vm67, 0.0
    %72 = vst.msk [vmem:[#allocation2 + $0x20] sm:$0xff] %vm67, 0.0
    %73 = vst.msk [vmem:[#allocation2 + $0x28] sm:$0xff] %vm67, 0.0
    %74 = vst.msk [vmem:[#allocation2 + $0x30] sm:$0xff] %vm67, 0.0
    %75 = vst.msk [vmem:[#allocation2 + $0x38] sm:$0xff] %vm67, 0.0
    %v76 = vld [vmem:[#allocation3] sm:$0xf]
    %v77 = vld [vmem:[#allocation3 + $0x4] sm:$0xf]
    %v78 = vld [vmem:[#allocation3 + $0x8] sm:$0xf]
    %v79 = vld [vmem:[#allocation3 + $0xc] sm:$0xf]
    %v80 = vld [vmem:[#allocation3 + $0x10] sm:$0xf]
    %v81 = vld [vmem:[#allocation3 + $0x14] sm:$0xf]
    %v82 = vld [vmem:[#allocation3 + $0x18] sm:$0xf]
    %v83 = vld [vmem:[#allocation3 + $0x1c] sm:$0xf]
    %v84 = vlaneseq
    %v85 = vshrl.u32 %v84, 7
    %v86 = vsub.s32 0, %v85
    %v87 = vrot.slane %v65, %v86
    %v96 = vunpack.c.l.b16 %v76
    %v97 = vunpack.c.l.b16 %v77
    %v98 = vunpack.c.l.b16 %v78
    %v99 = vunpack.c.l.b16 %v79
    %v100 = vunpack.c.l.b16 %v80
    %v101 = vunpack.c.l.b16 %v81
    %v102 = vunpack.c.l.b16 %v82
    %v103 = vunpack.c.l.b16 %v83
    %v104 = vpack.c.b16 %v97, %v96
    %v105 = vpack.c.b16 %v99, %v98
    %v106 = vpack.c.b16 %v101, %v100
    %v107 = vpack.c.b16 %v103, %v102
    %v128 = vunpack.c.l.b16 %v41
    %v129 = vunpack.c.l.b16 %v42
    %v130 = vunpack.c.l.b16 %v43
    %v131 = vunpack.c.l.b16 %v44
    %v132 = vunpack.c.l.b16 %v45
    %v133 = vunpack.c.l.b16 %v46
    %v134 = vunpack.c.l.b16 %v47
    %v135 = vunpack.c.l.b16 %v48
    %v136 = vunpack.c.l.b16 %v49
    %v137 = vunpack.c.l.b16 %v50
    %v138 = vunpack.c.l.b16 %v51
    %v139 = vunpack.c.l.b16 %v52
    %v140 = vunpack.c.l.b16 %v53
    %v141 = vunpack.c.l.b16 %v54
    %v142 = vunpack.c.l.b16 %v55
    %v143 = vunpack.c.l.b16 %v56
    %v144 = vpack.c.b16 %v129, %v128
    %v145 = vpack.c.b16 %v131, %v130
    %v146 = vpack.c.b16 %v133, %v132
    %v147 = vpack.c.b16 %v135, %v134
    %v148 = vpack.c.b16 %v137, %v136
    %v149 = vpack.c.b16 %v139, %v138
    %v150 = vpack.c.b16 %v141, %v140
    %v151 = vpack.c.b16 %v143, %v142
    %160 = vmatprep.subr.bf16.mxu0 0
    %161 = vmatpush1.bf16.msra.mxu0 %v151
    %162 = vmatprep.subr.bf16.mxu0 0
    %163 = vmatpush1.bf16.msra.mxu0 %v150
    %164 = vmatprep.subr.bf16.mxu0 0
    %165 = vmatpush1.bf16.msra.mxu0 %v149
    %166 = vmatprep.subr.bf16.mxu0 0
    %167 = vmatpush1.bf16.msra.mxu0 %v148
    %168 = vmatprep.subr.bf16.mxu0 0
    %169 = vmatpush1.bf16.msra.mxu0 %v147
    %170 = vmatprep.subr.bf16.mxu0 0
    %171 = vmatpush1.bf16.msra.mxu0 %v146
    %172 = vmatprep.subr.bf16.mxu0 0
    %173 = vmatpush1.bf16.msra.mxu0 %v145
    %174 = vmatprep.subr.bf16.mxu0 0
    %175 = vmatpush1.bf16.msra.mxu0 %v144
    %176 = vmatprep.subr.bf16.mxu0 0
    %177 = vmatpush2.bf16.msra.mxu0 0
    %178 = vmatprep.subr.bf16.mxu0 0
    %179 = vmatpush2.bf16.msra.mxu0 0
    %180 = vmatprep.subr.bf16.mxu0 0
    %181 = vmatpush2.bf16.msra.mxu0 0
    %182 = vmatprep.subr.bf16.mxu0 0
    %183 = vmatpush2.bf16.msra.mxu0 0
    %184 = vmatprep.subr.bf16.mxu0 0
    %185 = vmatpush2.bf16.msra.mxu0 0
    %186 = vmatprep.subr.bf16.mxu0 0
    %187 = vmatpush2.bf16.msra.mxu0 0
    %188 = vmatprep.subr.bf16.mxu0 0
    %189 = vmatpush2.bf16.msra.mxu0 0
    %190 = vmatprep.subr.bf16.mxu0 0
    %191 = vmatpush2.bf16.msra.mxu0 0
    %192 = vmatprep.mubr.bf16.mxu0 0
    %193 = vmatmul.mubr.bf16.gmra.mxu0 %v104
    %v194 = vpop.f32.mrf.mxu0
    %v195 = vadd.f32 %v87, %v194
    %v196 = vpop.f32.mrf.mxu0
    %v197 = vpop.f32.mrf.mxu0
    %v198 = vadd.f32 %v87, %v197
    %v199 = vpop.f32.mrf.mxu0
    %200 = vmatprep.mubr.bf16.mxu0 0
    %201 = vmatmul.mubr.bf16.gmra.mxu0 %v105
    %v202 = vpop.f32.mrf.mxu0
    %v203 = vadd.f32 %v87, %v202
    %v204 = vpop.f32.mrf.mxu0
    %v205 = vpop.f32.mrf.mxu0
    %v206 = vadd.f32 %v87, %v205
    %v207 = vpop.f32.mrf.mxu0
    %208 = vmatprep.mubr.bf16.mxu0 0
    %209 = vmatmul.mubr.bf16.gmra.mxu0 %v106
    %v210 = vpop.f32.mrf.mxu0
    %v211 = vadd.f32 %v87, %v210
    %v212 = vpop.f32.mrf.mxu0
    %v213 = vpop.f32.mrf.mxu0
    %v214 = vadd.f32 %v87, %v213
    %v215 = vpop.f32.mrf.mxu0
    %216 = vmatprep.mubr.bf16.mxu0 0
    %217 = vmatmul.mubr.bf16.gmra.mxu0 %v107
    %v218 = vpop.f32.mrf.mxu0
    %v219 = vadd.f32 %v87, %v218
    %v220 = vpop.f32.mrf.mxu0
    %v221 = vpop.f32.mrf.mxu0
    %v222 = vadd.f32 %v87, %v221
    %v223 = vpop.f32.mrf.mxu0
    %224 = vdwg.mxu0
    %v229 = vunpack.c.l.b16 %v57
    %v230 = vunpack.c.l.b16 %v58
    %v231 = vunpack.c.l.b16 %v59
    %v232 = vunpack.c.l.b16 %v60
    %v233 = vpack.c.b16 %v230, %v229
    %v234 = vpack.c.b16 %v232, %v231
    %v238 = vsel %vm67, 0, 0
    %240 = vmatprep.subr.bf16.mxu0 0
    %241 = vmatpush1.bf16.msra.mxu0 0
    %242 = vmatprep.subr.bf16.mxu0 0
    %243 = vmatpush1.bf16.msra.mxu0 0
    %244 = vmatprep.subr.bf16.mxu0 0
    %245 = vmatpush1.bf16.msra.mxu0 0
    %246 = vmatprep.subr.bf16.mxu0 0
    %247 = vmatpush1.bf16.msra.mxu0 0
    %248 = vmatprep.subr.bf16.mxu0 0
    %249 = vmatpush1.bf16.msra.mxu0 0
    %250 = vmatprep.subr.bf16.mxu0 0
    %251 = vmatpush1.bf16.msra.mxu0 0
    %252 = vmatprep.subr.bf16.mxu0 0
    %253 = vmatpush1.bf16.msra.mxu0 %v234
    %254 = vmatprep.subr.bf16.mxu0 0
    %255 = vmatpush1.bf16.msra.mxu0 %v233
    %256 = vmatprep.subr.bf16.mxu0 0
    %257 = vmatpush2.bf16.msra.mxu0 0
    %258 = vmatprep.subr.bf16.mxu0 0
    %259 = vmatpush2.bf16.msra.mxu0 0
    %260 = vmatprep.subr.bf16.mxu0 0
    %261 = vmatpush2.bf16.msra.mxu0 0
    %262 = vmatprep.subr.bf16.mxu0 0
    %263 = vmatpush2.bf16.msra.mxu0 0
    %264 = vmatprep.subr.bf16.mxu0 0
    %265 = vmatpush2.bf16.msra.mxu0 0
    %266 = vmatprep.subr.bf16.mxu0 0
    %267 = vmatpush2.bf16.msra.mxu0 0
    %268 = vmatprep.subr.bf16.mxu0 0
    %269 = vmatpush2.bf16.msra.mxu0 0
    %270 = vmatprep.subr.bf16.mxu0 0
    %271 = vmatpush2.bf16.msra.mxu0 0
    %272 = vmatprep.mubr.bf16.mxu0 0
    %273 = vmatmul.mubr.bf16.gmra.mxu0 %v238
    %v274 = vpop.f32.mrf.mxu0
    %v275 = vadd.f32 0.0, %v274
    %v276 = vpop.f32.mrf.mxu0
    %v277 = vpop.f32.mrf.mxu0
    %v278 = vpop.f32.mrf.mxu0
    %279 = vdwg.mxu0
    %v280 = vadd.f32 %v195, %v275
    %v281 = vxor.u32 %v280, 2147483648
    %v282 = vmul.f32 %v281, 1.442695
    %v283 = vpow.pop %v282
    %v284 = vadd.f32 %v283, 1.0
    %v285 = vrcp.pop %v284
    %v286 = vmul.f32 1.0, %v285
    %v287 = vtanh.pop %v280
    %v288 = vmul.f32 %v286, 0.0
    %290 = vrot.lane.b32.xlu0 %v287, 32
    %v291 = vpop.permute.xlu0 %290
    %v293 = vmul.f32 %v286, %v291
    %295 = vrot.lane.b32.xlu0 %v293, 32
    %v296 = vpop.permute.xlu0 %295
    %v298 = vadd.f32 %v288, %v296
    %v299 = vtanh.pop %v298
    %301 = vrot.lane.b32.xlu0 %v299, 32
    %v302 = vpop.permute.xlu0 %301
    %v304 = vmul.f32 %v286, %v302
    %306 = vrot.lane.b32.xlu0 %v304, 64
    %v307 = vpop.permute.xlu0 %306
    %v309 = vmul.f32 %v33, %v307
    %v310 = vadd.f32 %v309, 0.0
    %312 = vrot.lane.b32.xlu0 %v298, 96
    %v313 = vpop.permute.xlu0 %312
    %v315 = vmul.f32 %v33, %v313
    %v316 = vadd.f32 %v315, 0.0
    %vm317 = vcmask 130048
    %318 = vst.msk [vmem:[#allocation2] sm:$0xff] %vm317, %v309
    %vm319 = vcmask 261248
    %320 = vst.msk [vmem:[#allocation2 + $0x38] sm:$0xff] %vm319, %v309
    %v321 = vpack.c.bf16 %v310, %v310
    %v323 = vsel %vm67, %v321, 0
    %325 = vmatprep.subr.bf16.mxu0 0
    %326 = vmatpush1.bf16.msra.mxu0 0
    %327 = vmatprep.subr.bf16.mxu0 0
    %328 = vmatpush1.bf16.msra.mxu0 0
    %329 = vmatprep.subr.bf16.mxu0 0
    %330 = vmatpush1.bf16.msra.mxu0 0
    %331 = vmatprep.subr.bf16.mxu0 0
    %332 = vmatpush1.bf16.msra.mxu0 0
    %333 = vmatprep.subr.bf16.mxu0 0
    %334 = vmatpush1.bf16.msra.mxu0 0
    %335 = vmatprep.subr.bf16.mxu0 0
    %336 = vmatpush1.bf16.msra.mxu0 0
    %337 = vmatprep.subr.bf16.mxu0 0
    %338 = vmatpush1.bf16.msra.mxu0 %v234
    %339 = vmatprep.subr.bf16.mxu0 0
    %340 = vmatpush1.bf16.msra.mxu0 %v233
    %341 = vmatprep.subr.bf16.mxu0 0
    %342 = vmatpush2.bf16.msra.mxu0 0
    %343 = vmatprep.subr.bf16.mxu0 0
    %344 = vmatpush2.bf16.msra.mxu0 0
    %345 = vmatprep.subr.bf16.mxu0 0
    %346 = vmatpush2.bf16.msra.mxu0 0
    %347 = vmatprep.subr.bf16.mxu0 0
    %348 = vmatpush2.bf16.msra.mxu0 0
    %349 = vmatprep.subr.bf16.mxu0 0
    %350 = vmatpush2.bf16.msra.mxu0 0
    %351 = vmatprep.subr.bf16.mxu0 0
    %352 = vmatpush2.bf16.msra.mxu0 0
    %353 = vmatprep.subr.bf16.mxu0 0
    %354 = vmatpush2.bf16.msra.mxu0 0
    %355 = vmatprep.subr.bf16.mxu0 0
    %356 = vmatpush2.bf16.msra.mxu0 0
    %357 = vmatprep.mubr.bf16.mxu0 0
    %358 = vmatmul.mubr.bf16.gmra.mxu0 %v323
    %v359 = vpop.f32.mrf.mxu0
    %v360 = vadd.f32 0.0, %v359
    %v361 = vpop.f32.mrf.mxu0
    %v362 = vpop.f32.mrf.mxu0
    %v363 = vpop.f32.mrf.mxu0
    %364 = vdwg.mxu0
    %v365 = vadd.f32 %v198, %v360
    %v366 = vxor.u32 %v365, 2147483648
    %v367 = vmul.f32 %v366, 1.442695
    %v368 = vpow.pop %v367
    %v369 = vadd.f32 %v368, 1.0
    %v370 = vrcp.pop %v369
    %v371 = vmul.f32 1.0, %v370
    %v372 = vtanh.pop %v365
    %374 = vrot.lane.b32.xlu0 %v316, 32
    %v375 = vpop.permute.xlu0 %374
    %v377 = vmul.f32 %v371, %v375
    %379 = vrot.lane.b32.xlu0 %v372, 32
    %v380 = vpop.permute.xlu0 %379
    %v382 = vmul.f32 %v371, %v380
    %384 = vrot.lane.b32.xlu0 %v382, 32
    %v385 = vpop.permute.xlu0 %384
    %v387 = vadd.f32 %v377, %v385
    %v388 = vtanh.pop %v387
    %390 = vrot.lane.b32.xlu0 %v388, 32
    %v391 = vpop.permute.xlu0 %390
    %v393 = vmul.f32 %v371, %v391
    %395 = vrot.lane.b32.xlu0 %v310, 64
    %v396 = vpop.permute.xlu0 %395
    %v398 = vsub.f32 %v393, %v396
    %400 = vrot.lane.b32.xlu0 %v398, 64
    %v401 = vpop.permute.xlu0 %400
    %v403 = vmul.f32 %v34, %v401
    %v404 = vadd.f32 %v310, %v403
    %v405 = vsub.f32 %v387, %v375
    %407 = vrot.lane.b32.xlu0 %v405, 96
    %v408 = vpop.permute.xlu0 %407
    %v410 = vmul.f32 %v34, %v408
    %v411 = vadd.f32 %v316, %v410
    %413 = vrot.lane.b32.xlu0 %v393, 64
    %v414 = vpop.permute.xlu0 %413
    %v416 = vmul.f32 %v34, %v414
    %417 = vst.msk [vmem:[#allocation2 + $0x8] sm:$0xff] %vm317, %v416
    %418 = vst.msk [vmem:[#allocation2 + $0x30] sm:$0xff] %vm319, %v416
    %v419 = vpack.c.bf16 %v404, %v404
    %v421 = vsel %vm67, %v419, 0
    %423 = vmatprep.subr.bf16.mxu0 0
    %424 = vmatpush1.bf16.msra.mxu0 0
    %425 = vmatprep.subr.bf16.mxu0 0
    %426 = vmatpush1.bf16.msra.mxu0 0
    %427 = vmatprep.subr.bf16.mxu0 0
    %428 = vmatpush1.bf16.msra.mxu0 0
    %429 = vmatprep.subr.bf16.mxu0 0
    %430 = vmatpush1.bf16.msra.mxu0 0
    %431 = vmatprep.subr.bf16.mxu0 0
    %432 = vmatpush1.bf16.msra.mxu0 0
    %433 = vmatprep.subr.bf16.mxu0 0
    %434 = vmatpush1.bf16.msra.mxu0 0
    %435 = vmatprep.subr.bf16.mxu0 0
    %436 = vmatpush1.bf16.msra.mxu0 %v234
    %437 = vmatprep.subr.bf16.mxu0 0
    %438 = vmatpush1.bf16.msra.mxu0 %v233
    %439 = vmatprep.subr.bf16.mxu0 0
    %440 = vmatpush2.bf16.msra.mxu0 0
    %441 = vmatprep.subr.bf16.mxu0 0
    %442 = vmatpush2.bf16.msra.mxu0 0
    %443 = vmatprep.subr.bf16.mxu0 0
    %444 = vmatpush2.bf16.msra.mxu0 0
    %445 = vmatprep.subr.bf16.mxu0 0
    %446 = vmatpush2.bf16.msra.mxu0 0
    %447 = vmatprep.subr.bf16.mxu0 0
    %448 = vmatpush2.bf16.msra.mxu0 0
    %449 = vmatprep.subr.bf16.mxu0 0
    %450 = vmatpush2.bf16.msra.mxu0 0
    %451 = vmatprep.subr.bf16.mxu0 0
    %452 = vmatpush2.bf16.msra.mxu0 0
    %453 = vmatprep.subr.bf16.mxu0 0
    %454 = vmatpush2.bf16.msra.mxu0 0
    %455 = vmatprep.mubr.bf16.mxu0 0
    %456 = vmatmul.mubr.bf16.gmra.mxu0 %v421
    %v457 = vpop.f32.mrf.mxu0
    %v458 = vadd.f32 0.0, %v457
    %v459 = vpop.f32.mrf.mxu0
    %v460 = vpop.f32.mrf.mxu0
    %v461 = vpop.f32.mrf.mxu0
    %462 = vdwg.mxu0
    %v463 = vadd.f32 %v203, %v458
    %v464 = vxor.u32 %v463, 2147483648
    %v465 = vmul.f32 %v464, 1.442695
    %v466 = vpow.pop %v465
    %v467 = vadd.f32 %v466, 1.0
    %v468 = vrcp.pop %v467
    %v469 = vmul.f32 1.0, %v468
    %v470 = vtanh.pop %v463
    %472 = vrot.lane.b32.xlu0 %v411, 32
    %v473 = vpop.permute.xlu0 %472
    %v475 = vmul.f32 %v469, %v473
    %477 = vrot.lane.b32.xlu0 %v470, 32
    %v478 = vpop.permute.xlu0 %477
    %v480 = vmul.f32 %v469, %v478
    %482 = vrot.lane.b32.xlu0 %v480, 32
    %v483 = vpop.permute.xlu0 %482
    %v485 = vadd.f32 %v475, %v483
    %v486 = vtanh.pop %v485
    %488 = vrot.lane.b32.xlu0 %v486, 32
    %v489 = vpop.permute.xlu0 %488
    %v491 = vmul.f32 %v469, %v489
    %493 = vrot.lane.b32.xlu0 %v404, 64
    %v494 = vpop.permute.xlu0 %493
    %v496 = vsub.f32 %v491, %v494
    %498 = vrot.lane.b32.xlu0 %v496, 64
    %v499 = vpop.permute.xlu0 %498
    %v501 = vmul.f32 %v35, %v499
    %v502 = vadd.f32 %v404, %v501
    %v503 = vsub.f32 %v485, %v473
    %505 = vrot.lane.b32.xlu0 %v503, 96
    %v506 = vpop.permute.xlu0 %505
    %v508 = vmul.f32 %v35, %v506
    %v509 = vadd.f32 %v411, %v508
    %511 = vrot.lane.b32.xlu0 %v491, 64
    %v512 = vpop.permute.xlu0 %511
    %v514 = vmul.f32 %v35, %v512
    %515 = vst.msk [vmem:[#allocation2 + $0x10] sm:$0xff] %vm317, %v514
    %516 = vst.msk [vmem:[#allocation2 + $0x28] sm:$0xff] %vm319, %v514
    %v517 = vpack.c.bf16 %v502, %v502
    %v519 = vsel %vm67, %v517, 0
    %521 = vmatprep.subr.bf16.mxu0 0
    %522 = vmatpush1.bf16.msra.mxu0 0
    %523 = vmatprep.subr.bf16.mxu0 0
    %524 = vmatpush1.bf16.msra.mxu0 0
    %525 = vmatprep.subr.bf16.mxu0 0
    %526 = vmatpush1.bf16.msra.mxu0 0
    %527 = vmatprep.subr.bf16.mxu0 0
    %528 = vmatpush1.bf16.msra.mxu0 0
    %529 = vmatprep.subr.bf16.mxu0 0
    %530 = vmatpush1.bf16.msra.mxu0 0
    %531 = vmatprep.subr.bf16.mxu0 0
    %532 = vmatpush1.bf16.msra.mxu0 0
    %533 = vmatprep.subr.bf16.mxu0 0
    %534 = vmatpush1.bf16.msra.mxu0 %v234
    %535 = vmatprep.subr.bf16.mxu0 0
    %536 = vmatpush1.bf16.msra.mxu0 %v233
    %537 = vmatprep.subr.bf16.mxu0 0
    %538 = vmatpush2.bf16.msra.mxu0 0
    %539 = vmatprep.subr.bf16.mxu0 0
    %540 = vmatpush2.bf16.msra.mxu0 0
    %541 = vmatprep.subr.bf16.mxu0 0
    %542 = vmatpush2.bf16.msra.mxu0 0
    %543 = vmatprep.subr.bf16.mxu0 0
    %544 = vmatpush2.bf16.msra.mxu0 0
    %545 = vmatprep.subr.bf16.mxu0 0
    %546 = vmatpush2.bf16.msra.mxu0 0
    %547 = vmatprep.subr.bf16.mxu0 0
    %548 = vmatpush2.bf16.msra.mxu0 0
    %549 = vmatprep.subr.bf16.mxu0 0
    %550 = vmatpush2.bf16.msra.mxu0 0
    %551 = vmatprep.subr.bf16.mxu0 0
    %552 = vmatpush2.bf16.msra.mxu0 0
    %553 = vmatprep.mubr.bf16.mxu0 0
    %554 = vmatmul.mubr.bf16.gmra.mxu0 %v519
    %v555 = vpop.f32.mrf.mxu0
    %v556 = vadd.f32 0.0, %v555
    %v557 = vpop.f32.mrf.mxu0
    %v558 = vpop.f32.mrf.mxu0
    %v559 = vpop.f32.mrf.mxu0
    %560 = vdwg.mxu0
    %v561 = vadd.f32 %v206, %v556
    %v562 = vxor.u32 %v561, 2147483648
    %v563 = vmul.f32 %v562, 1.442695
    %v564 = vpow.pop %v563
    %v565 = vadd.f32 %v564, 1.0
    %v566 = vrcp.pop %v565
    %v567 = vmul.f32 1.0, %v566
    %v568 = vtanh.pop %v561
    %570 = vrot.lane.b32.xlu0 %v509, 32
    %v571 = vpop.permute.xlu0 %570
    %v573 = vmul.f32 %v567, %v571
    %575 = vrot.lane.b32.xlu0 %v568, 32
    %v576 = vpop.permute.xlu0 %575
    %v578 = vmul.f32 %v567, %v576
    %580 = vrot.lane.b32.xlu0 %v578, 32
    %v581 = vpop.permute.xlu0 %580
    %v583 = vadd.f32 %v573, %v581
    %v584 = vtanh.pop %v583
    %586 = vrot.lane.b32.xlu0 %v584, 32
    %v587 = vpop.permute.xlu0 %586
    %v589 = vmul.f32 %v567, %v587
    %591 = vrot.lane.b32.xlu0 %v502, 64
    %v592 = vpop.permute.xlu0 %591
    %v594 = vsub.f32 %v589, %v592
    %596 = vrot.lane.b32.xlu0 %v594, 64
    %v597 = vpop.permute.xlu0 %596
    %v599 = vmul.f32 %v36, %v597
    %v600 = vadd.f32 %v502, %v599
    %v601 = vsub.f32 %v583, %v571
    %603 = vrot.lane.b32.xlu0 %v601, 96
    %v604 = vpop.permute.xlu0 %603
    %v606 = vmul.f32 %v36, %v604
    %v607 = vadd.f32 %v509, %v606
    %609 = vrot.lane.b32.xlu0 %v589, 64
    %v610 = vpop.permute.xlu0 %609
    %v612 = vmul.f32 %v36, %v610
    %613 = vst.msk [vmem:[#allocation2 + $0x18] sm:$0xff] %vm317, %v612
    %614 = vst.msk [vmem:[#allocation2 + $0x20] sm:$0xff] %vm319, %v612
    %v615 = vpack.c.bf16 %v600, %v600
    %v617 = vsel %vm67, %v615, 0
    %619 = vmatprep.subr.bf16.mxu0 0
    %620 = vmatpush1.bf16.msra.mxu0 0
    %621 = vmatprep.subr.bf16.mxu0 0
    %622 = vmatpush1.bf16.msra.mxu0 0
    %623 = vmatprep.subr.bf16.mxu0 0
    %624 = vmatpush1.bf16.msra.mxu0 0
    %625 = vmatprep.subr.bf16.mxu0 0
    %626 = vmatpush1.bf16.msra.mxu0 0
    %627 = vmatprep.subr.bf16.mxu0 0
    %628 = vmatpush1.bf16.msra.mxu0 0
    %629 = vmatprep.subr.bf16.mxu0 0
    %630 = vmatpush1.bf16.msra.mxu0 0
    %631 = vmatprep.subr.bf16.mxu0 0
    %632 = vmatpush1.bf16.msra.mxu0 %v234
    %633 = vmatprep.subr.bf16.mxu0 0
    %634 = vmatpush1.bf16.msra.mxu0 %v233
    %635 = vmatprep.subr.bf16.mxu0 0
    %636 = vmatpush2.bf16.msra.mxu0 0
    %637 = vmatprep.subr.bf16.mxu0 0
    %638 = vmatpush2.bf16.msra.mxu0 0
    %639 = vmatprep.subr.bf16.mxu0 0
    %640 = vmatpush2.bf16.msra.mxu0 0
    %641 = vmatprep.subr.bf16.mxu0 0
    %642 = vmatpush2.bf16.msra.mxu0 0
    %643 = vmatprep.subr.bf16.mxu0 0
    %644 = vmatpush2.bf16.msra.mxu0 0
    %645 = vmatprep.subr.bf16.mxu0 0
    %646 = vmatpush2.bf16.msra.mxu0 0
    %647 = vmatprep.subr.bf16.mxu0 0
    %648 = vmatpush2.bf16.msra.mxu0 0
    %649 = vmatprep.subr.bf16.mxu0 0
    %650 = vmatpush2.bf16.msra.mxu0 0
    %651 = vmatprep.mubr.bf16.mxu0 0
    %652 = vmatmul.mubr.bf16.gmra.mxu0 %v617
    %v653 = vpop.f32.mrf.mxu0
    %v654 = vadd.f32 0.0, %v653
    %v655 = vpop.f32.mrf.mxu0
    %v656 = vpop.f32.mrf.mxu0
    %v657 = vpop.f32.mrf.mxu0
    %658 = vdwg.mxu0
    %v659 = vadd.f32 %v211, %v654
    %v660 = vxor.u32 %v659, 2147483648
    %v661 = vmul.f32 %v660, 1.442695
    %v662 = vpow.pop %v661
    %v663 = vadd.f32 %v662, 1.0
    %v664 = vrcp.pop %v663
    %v665 = vmul.f32 1.0, %v664
    %v666 = vtanh.pop %v659
    %668 = vrot.lane.b32.xlu0 %v607, 32
    %v669 = vpop.permute.xlu0 %668
    %v671 = vmul.f32 %v665, %v669
    %673 = vrot.lane.b32.xlu0 %v666, 32
    %v674 = vpop.permute.xlu0 %673
    %v676 = vmul.f32 %v665, %v674
    %678 = vrot.lane.b32.xlu0 %v676, 32
    %v679 = vpop.permute.xlu0 %678
    %v681 = vadd.f32 %v671, %v679
    %v682 = vtanh.pop %v681
    %684 = vrot.lane.b32.xlu0 %v682, 32
    %v685 = vpop.permute.xlu0 %684
    %v687 = vmul.f32 %v665, %v685
    %689 = vrot.lane.b32.xlu0 %v600, 64
    %v690 = vpop.permute.xlu0 %689
    %v692 = vsub.f32 %v687, %v690
    %694 = vrot.lane.b32.xlu0 %v692, 64
    %v695 = vpop.permute.xlu0 %694
    %v697 = vmul.f32 %v37, %v695
    %v698 = vadd.f32 %v600, %v697
    %v699 = vsub.f32 %v681, %v669
    %701 = vrot.lane.b32.xlu0 %v699, 96
    %v702 = vpop.permute.xlu0 %701
    %v704 = vmul.f32 %v37, %v702
    %v705 = vadd.f32 %v607, %v704
    %707 = vrot.lane.b32.xlu0 %v687, 64
    %v708 = vpop.permute.xlu0 %707
    %v710 = vmul.f32 %v37, %v708
    %711 = vst.msk [vmem:[#allocation2 + $0x20] sm:$0xff] %vm317, %v710
    %712 = vst.msk [vmem:[#allocation2 + $0x18] sm:$0xff] %vm319, %v710
    %v713 = vpack.c.bf16 %v698, %v698
    %v715 = vsel %vm67, %v713, 0
    %717 = vmatprep.subr.bf16.mxu0 0
    %718 = vmatpush1.bf16.msra.mxu0 0
    %719 = vmatprep.subr.bf16.mxu0 0
    %720 = vmatpush1.bf16.msra.mxu0 0
    %721 = vmatprep.subr.bf16.mxu0 0
    %722 = vmatpush1.bf16.msra.mxu0 0
    %723 = vmatprep.subr.bf16.mxu0 0
    %724 = vmatpush1.bf16.msra.mxu0 0
    %725 = vmatprep.subr.bf16.mxu0 0
    %726 = vmatpush1.bf16.msra.mxu0 0
    %727 = vmatprep.subr.bf16.mxu0 0
    %728 = vmatpush1.bf16.msra.mxu0 0
    %729 = vmatprep.subr.bf16.mxu0 0
    %730 = vmatpush1.bf16.msra.mxu0 %v234
    %731 = vmatprep.subr.bf16.mxu0 0
    %732 = vmatpush1.bf16.msra.mxu0 %v233
    %733 = vmatprep.subr.bf16.mxu0 0
    %734 = vmatpush2.bf16.msra.mxu0 0
    %735 = vmatprep.subr.bf16.mxu0 0
    %736 = vmatpush2.bf16.msra.mxu0 0
    %737 = vmatprep.subr.bf16.mxu0 0
    %738 = vmatpush2.bf16.msra.mxu0 0
    %739 = vmatprep.subr.bf16.mxu0 0
    %740 = vmatpush2.bf16.msra.mxu0 0
    %741 = vmatprep.subr.bf16.mxu0 0
    %742 = vmatpush2.bf16.msra.mxu0 0
    %743 = vmatprep.subr.bf16.mxu0 0
    %744 = vmatpush2.bf16.msra.mxu0 0
    %745 = vmatprep.subr.bf16.mxu0 0
    %746 = vmatpush2.bf16.msra.mxu0 0
    %747 = vmatprep.subr.bf16.mxu0 0
    %748 = vmatpush2.bf16.msra.mxu0 0
    %749 = vmatprep.mubr.bf16.mxu0 0
    %750 = vmatmul.mubr.bf16.gmra.mxu0 %v715
    %v751 = vpop.f32.mrf.mxu0
    %v752 = vadd.f32 0.0, %v751
    %v753 = vpop.f32.mrf.mxu0
    %v754 = vpop.f32.mrf.mxu0
    %v755 = vpop.f32.mrf.mxu0
    %756 = vdwg.mxu0
    %v757 = vadd.f32 %v214, %v752
    %v758 = vxor.u32 %v757, 2147483648
    %v759 = vmul.f32 %v758, 1.442695
    %v760 = vpow.pop %v759
    %v761 = vadd.f32 %v760, 1.0
    %v762 = vrcp.pop %v761
    %v763 = vmul.f32 1.0, %v762
    %v764 = vtanh.pop %v757
    %766 = vrot.lane.b32.xlu0 %v705, 32
    %v767 = vpop.permute.xlu0 %766
    %v769 = vmul.f32 %v763, %v767
    %771 = vrot.lane.b32.xlu0 %v764, 32
    %v772 = vpop.permute.xlu0 %771
    %v774 = vmul.f32 %v763, %v772
    %776 = vrot.lane.b32.xlu0 %v774, 32
    %v777 = vpop.permute.xlu0 %776
    %v779 = vadd.f32 %v769, %v777
    %v780 = vtanh.pop %v779
    %782 = vrot.lane.b32.xlu0 %v780, 32
    %v783 = vpop.permute.xlu0 %782
    %v785 = vmul.f32 %v763, %v783
    %787 = vrot.lane.b32.xlu0 %v698, 64
    %v788 = vpop.permute.xlu0 %787
    %v790 = vsub.f32 %v785, %v788
    %792 = vrot.lane.b32.xlu0 %v790, 64
    %v793 = vpop.permute.xlu0 %792
    %v795 = vmul.f32 %v38, %v793
    %v796 = vadd.f32 %v698, %v795
    %v797 = vsub.f32 %v779, %v767
    %799 = vrot.lane.b32.xlu0 %v797, 96
    %v800 = vpop.permute.xlu0 %799
    %v802 = vmul.f32 %v38, %v800
    %v803 = vadd.f32 %v705, %v802
    %805 = vrot.lane.b32.xlu0 %v785, 64
    %v806 = vpop.permute.xlu0 %805
    %v808 = vmul.f32 %v38, %v806
    %809 = vst.msk [vmem:[#allocation2 + $0x28] sm:$0xff] %vm317, %v808
    %810 = vst.msk [vmem:[#allocation2 + $0x10] sm:$0xff] %vm319, %v808
    %v811 = vpack.c.bf16 %v796, %v796
    %v813 = vsel %vm67, %v811, 0
    %815 = vmatprep.subr.bf16.mxu0 0
    %816 = vmatpush1.bf16.msra.mxu0 0
    %817 = vmatprep.subr.bf16.mxu0 0
    %818 = vmatpush1.bf16.msra.mxu0 0
    %819 = vmatprep.subr.bf16.mxu0 0
    %820 = vmatpush1.bf16.msra.mxu0 0
    %821 = vmatprep.subr.bf16.mxu0 0
    %822 = vmatpush1.bf16.msra.mxu0 0
    %823 = vmatprep.subr.bf16.mxu0 0
    %824 = vmatpush1.bf16.msra.mxu0 0
    %825 = vmatprep.subr.bf16.mxu0 0
    %826 = vmatpush1.bf16.msra.mxu0 0
    %827 = vmatprep.subr.bf16.mxu0 0
    %828 = vmatpush1.bf16.msra.mxu0 %v234
    %829 = vmatprep.subr.bf16.mxu0 0
    %830 = vmatpush1.bf16.msra.mxu0 %v233
    %831 = vmatprep.subr.bf16.mxu0 0
    %832 = vmatpush2.bf16.msra.mxu0 0
    %833 = vmatprep.subr.bf16.mxu0 0
    %834 = vmatpush2.bf16.msra.mxu0 0
    %835 = vmatprep.subr.bf16.mxu0 0
    %836 = vmatpush2.bf16.msra.mxu0 0
    %837 = vmatprep.subr.bf16.mxu0 0
    %838 = vmatpush2.bf16.msra.mxu0 0
    %839 = vmatprep.subr.bf16.mxu0 0
    %840 = vmatpush2.bf16.msra.mxu0 0
    %841 = vmatprep.subr.bf16.mxu0 0
    %842 = vmatpush2.bf16.msra.mxu0 0
    %843 = vmatprep.subr.bf16.mxu0 0
    %844 = vmatpush2.bf16.msra.mxu0 0
    %845 = vmatprep.subr.bf16.mxu0 0
    %846 = vmatpush2.bf16.msra.mxu0 0
    %847 = vmatprep.mubr.bf16.mxu0 0
    %848 = vmatmul.mubr.bf16.gmra.mxu0 %v813
    %v849 = vpop.f32.mrf.mxu0
    %v850 = vadd.f32 0.0, %v849
    %v851 = vpop.f32.mrf.mxu0
    %v852 = vpop.f32.mrf.mxu0
    %v853 = vpop.f32.mrf.mxu0
    %854 = vdwg.mxu0
    %v855 = vadd.f32 %v219, %v850
    %v856 = vxor.u32 %v855, 2147483648
    %v857 = vmul.f32 %v856, 1.442695
    %v858 = vpow.pop %v857
    %v859 = vadd.f32 %v858, 1.0
    %v860 = vrcp.pop %v859
    %v861 = vmul.f32 1.0, %v860
    %v862 = vtanh.pop %v855
    %864 = vrot.lane.b32.xlu0 %v803, 32
    %v865 = vpop.permute.xlu0 %864
    %v867 = vmul.f32 %v861, %v865
    %869 = vrot.lane.b32.xlu0 %v862, 32
    %v870 = vpop.permute.xlu0 %869
    %v872 = vmul.f32 %v861, %v870
    %874 = vrot.lane.b32.xlu0 %v872, 32
    %v875 = vpop.permute.xlu0 %874
    %v877 = vadd.f32 %v867, %v875
    %v878 = vtanh.pop %v877
    %880 = vrot.lane.b32.xlu0 %v878, 32
    %v881 = vpop.permute.xlu0 %880
    %v883 = vmul.f32 %v861, %v881
    %885 = vrot.lane.b32.xlu0 %v796, 64
    %v886 = vpop.permute.xlu0 %885
    %v888 = vsub.f32 %v883, %v886
    %890 = vrot.lane.b32.xlu0 %v888, 64
    %v891 = vpop.permute.xlu0 %890
    %v893 = vmul.f32 %v39, %v891
    %v894 = vadd.f32 %v796, %v893
    %v895 = vsub.f32 %v877, %v865
    %897 = vrot.lane.b32.xlu0 %v895, 96
    %v898 = vpop.permute.xlu0 %897
    %v900 = vmul.f32 %v39, %v898
    %v901 = vadd.f32 %v803, %v900
    %903 = vrot.lane.b32.xlu0 %v883, 64
    %v904 = vpop.permute.xlu0 %903
    %v906 = vmul.f32 %v39, %v904
    %907 = vst.msk [vmem:[#allocation2 + $0x30] sm:$0xff] %vm317, %v906
    %908 = vst.msk [vmem:[#allocation2 + $0x8] sm:$0xff] %vm319, %v906
    %v909 = vpack.c.bf16 %v894, %v894
    %v911 = vsel %vm67, %v909, 0
    %913 = vmatprep.subr.bf16.mxu0 0
    %914 = vmatpush1.bf16.msra.mxu0 0
    %915 = vmatprep.subr.bf16.mxu0 0
    %916 = vmatpush1.bf16.msra.mxu0 0
    %917 = vmatprep.subr.bf16.mxu0 0
    %918 = vmatpush1.bf16.msra.mxu0 0
    %919 = vmatprep.subr.bf16.mxu0 0
    %920 = vmatpush1.bf16.msra.mxu0 0
    %921 = vmatprep.subr.bf16.mxu0 0
    %922 = vmatpush1.bf16.msra.mxu0 0
    %923 = vmatprep.subr.bf16.mxu0 0
    %924 = vmatpush1.bf16.msra.mxu0 0
    %925 = vmatprep.subr.bf16.mxu0 0
    %926 = vmatpush1.bf16.msra.mxu0 %v234
    %927 = vmatprep.subr.bf16.mxu0 0
    %928 = vmatpush1.bf16.msra.mxu0 %v233
    %929 = vmatprep.subr.bf16.mxu0 0
    %930 = vmatpush2.bf16.msra.mxu0 0
    %931 = vmatprep.subr.bf16.mxu0 0
    %932 = vmatpush2.bf16.msra.mxu0 0
    %933 = vmatprep.subr.bf16.mxu0 0
    %934 = vmatpush2.bf16.msra.mxu0 0
    %935 = vmatprep.subr.bf16.mxu0 0
    %936 = vmatpush2.bf16.msra.mxu0 0
    %937 = vmatprep.subr.bf16.mxu0 0
    %938 = vmatpush2.bf16.msra.mxu0 0
    %939 = vmatprep.subr.bf16.mxu0 0
    %940 = vmatpush2.bf16.msra.mxu0 0
    %941 = vmatprep.subr.bf16.mxu0 0
    %942 = vmatpush2.bf16.msra.mxu0 0
    %943 = vmatprep.subr.bf16.mxu0 0
    %944 = vmatpush2.bf16.msra.mxu0 0
    %945 = vmatprep.mubr.bf16.mxu0 0
    %946 = vmatmul.mubr.bf16.gmra.mxu0 %v911
    %v947 = vpop.f32.mrf.mxu0
    %v948 = vadd.f32 0.0, %v947
    %v949 = vpop.f32.mrf.mxu0
    %v950 = vpop.f32.mrf.mxu0
    %v951 = vpop.f32.mrf.mxu0
    %952 = vdwg.mxu0
    %v953 = vadd.f32 %v222, %v948
    %v954 = vxor.u32 %v953, 2147483648
    %v955 = vmul.f32 %v954, 1.442695
    %v956 = vpow.pop %v955
    %v957 = vadd.f32 %v956, 1.0
    %v958 = vrcp.pop %v957
    %v959 = vmul.f32 1.0, %v958
    %v960 = vtanh.pop %v953
    %962 = vrot.lane.b32.xlu0 %v901, 32
    %v963 = vpop.permute.xlu0 %962
    %v965 = vmul.f32 %v959, %v963
    %967 = vrot.lane.b32.xlu0 %v960, 32
    %v968 = vpop.permute.xlu0 %967
    %v970 = vmul.f32 %v959, %v968
    %972 = vrot.lane.b32.xlu0 %v970, 32
    %v973 = vpop.permute.xlu0 %972
    %v975 = vadd.f32 %v965, %v973
    %v976 = vtanh.pop %v975
    %978 = vrot.lane.b32.xlu0 %v976, 32
    %v979 = vpop.permute.xlu0 %978
    %v981 = vmul.f32 %v959, %v979
    %983 = vrot.lane.b32.xlu0 %v981, 64
    %v984 = vpop.permute.xlu0 %983
    %v986 = vmul.f32 %v40, %v984
    %987 = vst.msk [vmem:[#allocation2 + $0x38] sm:$0xff] %vm317, %v986
    %988 = vst.msk [vmem:[#allocation2] sm:$0xff] %vm319, %v986
    %v989 = vld [vmem:[#allocation2] sm:$0xff]
    %v990 = vld [vmem:[#allocation2 + $0x8] sm:$0xff]
    %v991 = vld [vmem:[#allocation2 + $0x10] sm:$0xff]
    %v992 = vld [vmem:[#allocation2 + $0x18] sm:$0xff]
    %v993 = vld [vmem:[#allocation2 + $0x20] sm:$0xff]
    %v994 = vld [vmem:[#allocation2 + $0x28] sm:$0xff]
    %v995 = vld [vmem:[#allocation2 + $0x30] sm:$0xff]
    %v996 = vld [vmem:[#allocation2 + $0x38] sm:$0xff]
    %v997 = vpack.c.bf16 %v990, %v989
    %v998 = vpack.c.bf16 %v992, %v991
    %v999 = vpack.c.bf16 %v994, %v993
    %v1000 = vpack.c.bf16 %v996, %v995
    %v1001 = vlaneseq
    %v1002 = vshrl.u32 %v1001, 7
    %v1003 = vsub.s32 0, %v1002
    %v1004 = vrot.slane %v66, %v1003
    %v1009 = vunpack.c.l.b16 %v61
    %v1010 = vunpack.c.l.b16 %v62
    %v1011 = vunpack.c.l.b16 %v63
    %v1012 = vunpack.c.l.b16 %v64
    %v1013 = vpack.c.b16 %v1010, %v1009
    %v1014 = vpack.c.b16 %v1012, %v1011
    %v1018 = vsel %vm67, %v997, 0
    %v1021 = vsel %vm67, %v998, 0
    %v1024 = vsel %vm67, %v999, 0
    %v1027 = vsel %vm67, %v1000, 0
    %1029 = vmatprep.subr.bf16.mxu0 0
    %1030 = vmatpush1.bf16.msra.mxu0 0
    %1031 = vmatprep.subr.bf16.mxu0 0
    %1032 = vmatpush1.bf16.msra.mxu0 0
    %1033 = vmatprep.subr.bf16.mxu0 0
    %1034 = vmatpush1.bf16.msra.mxu0 0
    %1035 = vmatprep.subr.bf16.mxu0 0
    %1036 = vmatpush1.bf16.msra.mxu0 0
    %1037 = vmatprep.subr.bf16.mxu0 0
    %1038 = vmatpush1.bf16.msra.mxu0 0
    %1039 = vmatprep.subr.bf16.mxu0 0
    %1040 = vmatpush1.bf16.msra.mxu0 0
    %1041 = vmatprep.subr.bf16.mxu0 0
    %1042 = vmatpush1.bf16.msra.mxu0 %v1014
    %1043 = vmatprep.subr.bf16.mxu0 0
    %1044 = vmatpush1.bf16.msra.mxu0 %v1013
    %1045 = vmatprep.subr.bf16.mxu0 0
    %1046 = vmatpush2.bf16.msra.mxu0 0
    %1047 = vmatprep.subr.bf16.mxu0 0
    %1048 = vmatpush2.bf16.msra.mxu0 0
    %1049 = vmatprep.subr.bf16.mxu0 0
    %1050 = vmatpush2.bf16.msra.mxu0 0
    %1051 = vmatprep.subr.bf16.mxu0 0
    %1052 = vmatpush2.bf16.msra.mxu0 0
    %1053 = vmatprep.subr.bf16.mxu0 0
    %1054 = vmatpush2.bf16.msra.mxu0 0
    %1055 = vmatprep.subr.bf16.mxu0 0
    %1056 = vmatpush2.bf16.msra.mxu0 0
    %1057 = vmatprep.subr.bf16.mxu0 0
    %1058 = vmatpush2.bf16.msra.mxu0 0
    %1059 = vmatprep.subr.bf16.mxu0 0
    %1060 = vmatpush2.bf16.msra.mxu0 0
    %1061 = vmatprep.mubr.bf16.mxu0 0
    %1062 = vmatmul.mubr.bf16.gmra.mxu0 %v1018
    %v1063 = vpop.f32.mrf.mxu0
    %v1064 = vadd.f32 %v1004, %v1063
    %v1065 = vpop.f32.mrf.mxu0
    %v1066 = vpop.f32.mrf.mxu0
    %v1067 = vadd.f32 %v1004, %v1066
    %v1068 = vpop.f32.mrf.mxu0
    %1069 = vmatprep.mubr.bf16.mxu0 0
    %1070 = vmatmul.mubr.bf16.gmra.mxu0 %v1021
    %v1071 = vpop.f32.mrf.mxu0
    %v1072 = vadd.f32 %v1004, %v1071
    %v1073 = vpop.f32.mrf.mxu0
    %v1074 = vpop.f32.mrf.mxu0
    %v1075 = vadd.f32 %v1004, %v1074
    %v1076 = vpop.f32.mrf.mxu0
    %1077 = vmatprep.mubr.bf16.mxu0 0
    %1078 = vmatmul.mubr.bf16.gmra.mxu0 %v1024
    %v1079 = vpop.f32.mrf.mxu0
    %v1080 = vadd.f32 %v1004, %v1079
    %v1081 = vpop.f32.mrf.mxu0
    %v1082 = vpop.f32.mrf.mxu0
    %v1083 = vadd.f32 %v1004, %v1082
    %v1084 = vpop.f32.mrf.mxu0
    %1085 = vmatprep.mubr.bf16.mxu0 0
    %1086 = vmatmul.mubr.bf16.gmra.mxu0 %v1027
    %v1087 = vpop.f32.mrf.mxu0
    %v1088 = vadd.f32 %v1004, %v1087
    %v1089 = vpop.f32.mrf.mxu0
    %v1090 = vpop.f32.mrf.mxu0
    %v1091 = vadd.f32 %v1004, %v1090
    %v1092 = vpop.f32.mrf.mxu0
    %1093 = vdwg.mxu0
    %1094 = vst [vmem:[#allocation6] sm:$0xff] %v1064
    %1095 = vst [vmem:[#allocation6 + $0x8] sm:$0xff] %v1067
    %1096 = vst [vmem:[#allocation6 + $0x10] sm:$0xff] %v1072
    %1097 = vst [vmem:[#allocation6 + $0x18] sm:$0xff] %v1075
    %1098 = vst [vmem:[#allocation6 + $0x20] sm:$0xff] %v1080
    %1099 = vst [vmem:[#allocation6 + $0x28] sm:$0xff] %v1083
    %1100 = vst [vmem:[#allocation6 + $0x30] sm:$0xff] %v1088
    %1101 = vst [vmem:[#allocation6 + $0x38] sm:$0xff] %v1091
    // Predicated region
    $region22: #{tpu_custom_call.1} parent=1 // pred_check
      _
    $region23: #{tpu_custom_call.1} parent=1 // pred_check_branch
      %1103 = sbr.rel (0) target = $region25
    $region24: #{tpu_custom_call.1} parent=1 // pred_region
      %s1105 = ssub.s32 1024, 1024
      %1106 = vsyncadd [#allocation5], %s1105
      %s1107 = sshll.u32 [#allocation6], 4
      %s1108 = int_to_ptr.vmem [resolvable:$true] %s1107
      %1113 = dma.vmem_to_hbm [thread:$0]  %s1108, 1024, %s4, [#allocation5], 128, 128, 8
    $region25: #{tpu_custom_call.1} parent=1 // pred_fallthru
      _
    // Predicated region
    $region26: #{tpu_custom_call.1} parent=1 // pred_check
      _
    $region27: #{tpu_custom_call.1} parent=1 // pred_check_branch
      %1115 = sbr.rel (0) target = $region29
    $region28: #{tpu_custom_call.1} parent=1 // pred_region
      %1116 = dma.done [#allocation5], 1024
    $region29: #{tpu_custom_call.1} parent=1 // pred_fallthru
      _
    %1117 = vsyncpa [#allocation4], 1
    %1118 = vsyncpa [#allocation5], 1

</llo_original>
